<compile_context>
chip_gen: v6e
topology: v6e:2x2x1
jax: 0.10.0
libtpu: 0.0.40
codegen_flags: <defaults>
</compile_context>

<pallas_src>
import functools

import jax
import jax.numpy as jnp
from jax.experimental import pallas as pl
from jax.experimental.pallas import tpu as pltpu


def _lstm_fc_kernel(x_ref, w_ref, b_ref, out_ref, xg0_ref, *, hidden_size):
    T, D = x_ref.shape
    G = w_ref.shape[1]          # lane-aligned gate / carried-state width (=128)
    H = hidden_size             # native hidden size (32)

    # Packed bias slab: one DMA, sliced here (static sublane offsets).
    b0 = b_ref[0:1, :]
    b1 = b_ref[1:2, :]
    bfc1 = b_ref[2:3, :]
    bfc2 = b_ref[3:4, :]

    # Row offsets into the packed weight slab (all static, 8-aligned).
    o_wih0 = 0
    o_whh0 = D
    o_wih1 = D + G
    o_whh1 = D + 2 * G
    o_wfc1 = D + 3 * G
    o_wfc2 = D + 4 * G

    # Hoisted layer-0 input projection for all T steps: one (T,D)x(D,G) MXU
    # matmul, staged in VMEM scratch and read back one row per step.
    xg0_ref[...] = (jnp.dot(x_ref[...], w_ref[o_wih0:o_wih0 + D, :],
                            preferred_element_type=jnp.float32) + b0)

    def gates_to_hc(gates, c):
        # gates: (1, G) = [i | f | g | o] (PyTorch order), H lanes per block.
        # Nonlinearities on the FULL vreg (2 EUP calls), then lane-rotate the
        # f/g/o blocks down to lanes [0,H) on the XLU.
        sg = jax.nn.sigmoid(gates)
        tg = jnp.tanh(gates)
        i_al = sg                                       # i already at [0, H)
        f_al = pltpu.roll(sg, shift=G - H, axis=1)      # f: [H,2H)  -> [0,H)
        g_al = pltpu.roll(tg, shift=G - 2 * H, axis=1)  # g: [2H,3H) -> [0,H)
        o_al = pltpu.roll(sg, shift=G - 3 * H, axis=1)  # o: [3H,4H) -> [0,H)
        c_new = f_al * c + i_al * g_al
        h_new = o_al * jnp.tanh(c_new)
        # Lanes [H, G) of h_new/c_new carry bounded junk; every consumer
        # (whh0 / wih1 / whh1 / wfc1) has zero rows there, so it never leaks.
        return h_new, c_new

    zeros = jnp.zeros((1, G), jnp.float32)
    h1, c1, h2, c2 = zeros, zeros, zeros, zeros
    # Un-fused layer-1: r1 = h2 @ whh1 + b1 depends only on the PREVIOUS step,
    # so it is computed off the next step's h1 critical path. h2(0-) == 0.
    r1 = b1

    hs = []
    for t in range(T):          # fully unrolled: T is static and small
        # layer 0: only the recurrent projection sits on the serial chain
        g0 = xg0_ref[t:t + 1, :] + jnp.dot(
            h1, w_ref[o_whh0:o_whh0 + G, :], preferred_element_type=jnp.float32)
        h1, c1 = gates_to_hc(g0, c1)
        # layer 1: only the h1-dependent half remains after h1(t)
        g1 = r1 + jnp.dot(h1, w_ref[o_wih1:o_wih1 + G, :],
                          preferred_element_type=jnp.float32)
        h2, c2 = gates_to_hc(g1, c2)
        hs.append(h2)
        if t + 1 < T:
            r1 = b1 + jnp.dot(h2, w_ref[o_whh1:o_whh1 + G, :],
                              preferred_element_type=jnp.float32)

    hseq = jnp.concatenate(hs, axis=0)      # (T, G); cols [H, G) are dead junk

    # FC head: Linear(H,H) -> ReLU -> Dropout(0.5) (eval = identity) -> Linear(H,11)
    hid = jnp.maximum(
        jnp.dot(hseq, w_ref[o_wfc1:o_wfc1 + G, :],
                preferred_element_type=jnp.float32) + bfc1, 0.0)
    out_ref[...] = (jnp.dot(hid, w_ref[o_wfc2:o_wfc2 + G, :],
                            preferred_element_type=jnp.float32)
                    + bfc2)                 # (T, G) lane-dense


def prepare_params(params):
    """One-time packing of the LSTM/FC parameters into two kernel slabs.

    Call once (outside the per-inference hot path). Native gate column layout
    is kept (i|f|g|o, H columns each); only rows are zero-padded to the
    carried-state width G so junk lanes of h/c contribute nothing.
    """
    D = params["wih0"].shape[0]
    H = params["whh0"].shape[0]
    n_out = params["bfc2"].shape[-1]
    G = max(128, ((4 * H + 127) // 128) * 128)   # lane-aligned gate width
    Dp = ((D + 7) // 8) * 8                      # sublane-aligned input width

    pad_cols = lambda w, c: jnp.pad(w, ((0, 0), (0, c - w.shape[1])))
    pad_rows = lambda w, r: jnp.pad(w, ((0, r - w.shape[0]), (0, 0)))

    wih0 = pad_rows(pad_cols(params["wih0"], G), Dp)        # (Dp, G)
    whh0 = pad_rows(pad_cols(params["whh0"], G), G)         # (G,  G)
    wih1 = pad_rows(pad_cols(params["wih1"], G), G)
    whh1 = pad_rows(pad_cols(params["whh1"], G), G)
    wfc1 = pad_rows(pad_cols(params["wfc1"], G), G)
    wfc2 = pad_rows(pad_cols(params["wfc2"], G), G)
    w_slab = jnp.concatenate([wih0, whh0, wih1, whh1, wfc1, wfc2], axis=0)

    b_slab = jnp.concatenate([pad_cols(params["b0"], G),
                              pad_cols(params["b1"], G),
                              pad_cols(params["bfc1"], G),
                              pad_cols(params["bfc2"], G)], axis=0)   # (4, G)

    return {"w": w_slab, "b": b_slab,
            "hidden_size": H, "input_size_padded": Dp, "n_classes": n_out}


def lstm_model_forward(feats, packed):
    """feats: (T, D) f32 pre-extracted encoder features. Returns (T, 11) logits."""
    T, D = feats.shape
    H = packed["hidden_size"]
    Dp = packed["input_size_padded"]
    n_out = packed["n_classes"]
    G = packed["w"].shape[1]

    Tp = ((T + 7) // 8) * 8
    if Tp != T or Dp != D:                    # static (trace-time) decision
        feats = jnp.pad(feats, ((0, Tp - T), (0, Dp - D)))

    vmem = pl.BlockSpec(memory_space=pltpu.MemorySpace.VMEM)
    out = pl.pallas_call(
        functools.partial(_lstm_fc_kernel, hidden_size=H),
        out_shape=jax.ShapeDtypeStruct((Tp, G), jnp.float32),
        in_specs=[vmem, vmem, vmem],
        out_specs=vmem,
        scratch_shapes=[pltpu.VMEM((Tp, G), jnp.float32)],   # staged xg0
    )(feats, packed["w"], packed["b"])
    return out[:T, :n_out]


def init_params(key, input_size, hidden_size, n_classes=11):
    """Deterministic synthetic parameters (PyTorch-style uniform(-1/sqrt(H), 1/sqrt(H)))."""
    ks = jax.random.split(key, 14)
    s = 1.0 / jnp.sqrt(jnp.float32(hidden_size))
    u = lambda k, shape: jax.random.uniform(k, shape, jnp.float32, -s, s)
    H, D = hidden_size, input_size
    return {
        # layer 0 (stored transposed relative to PyTorch: (in, 4H), gate order i,f,g,o)
        "wih0": u(ks[0], (D, 4 * H)),
        "whh0": u(ks[1], (H, 4 * H)),
        "b0":   (u(ks[2], (1, 4 * H)) + u(ks[3], (1, 4 * H))),   # b_ih + b_hh
        # layer 1
        "wih1": u(ks[4], (H, 4 * H)),
        "whh1": u(ks[5], (H, 4 * H)),
        "b1":   (u(ks[6], (1, 4 * H)) + u(ks[7], (1, 4 * H))),
        # fc head (transposed: (in, out))
        "wfc1": u(ks[8], (H, H)),
        "bfc1": u(ks[9], (1, H)),
        "wfc2": u(ks[10], (H, n_classes)),
        "bfc2": u(ks[11], (1, n_classes)),
    }


def reference_forward(feats, params):
    """Pure-JAX reference of the same math (for correctness check)."""
    H = params["whh0"].shape[0]

    def cell(x_t, h, c, wih, whh, b):
        gates = x_t @ wih + h @ whh + b
        i = jax.nn.sigmoid(gates[:, 0:H])
        f = jax.nn.sigmoid(gates[:, H:2 * H])
        g = jnp.tanh(gates[:, 2 * H:3 * H])
        o = jax.nn.sigmoid(gates[:, 3 * H:4 * H])
        c_new = f * c + i * g
        return o * jnp.tanh(c_new), c_new

    def step(carry, x_t):
        h1, c1, h2, c2 = carry
        h1, c1 = cell(x_t[None, :], h1, c1, params["wih0"], params["whh0"], params["b0"])
        h2, c2 = cell(h1, h2, c2, params["wih1"], params["whh1"], params["b1"])
        return (h1, c1, h2, c2), h2[0]

    zeros = jnp.zeros((1, H), jnp.float32)
    _, hseq = jax.lax.scan(step, (zeros, zeros, zeros, zeros), feats)
    hid = jnp.maximum(hseq @ params["wfc1"] + params["bfc1"], 0.0)
    return hid @ params["wfc2"] + params["bfc2"]


if __name__ == "__main__":
    T, D, H = 8, 64, 32   # seq=8 frames, input_size=64, hidden_size=32, 11 classes
    key = jax.random.PRNGKey(0)
    k_feat, k_param = jax.random.split(key)

    feats = jax.random.normal(k_feat, (T, D), jnp.float32)  # pre-extracted encoder features
    params = init_params(k_param, D, H)
    packed = prepare_params(params)          # one-time param prep (off the hot path)

    out = lstm_model_forward(feats, packed)
    out = jax.block_until_ready(out)

    ref = reference_forward(feats, params)
    assert out.shape == (T, 11), out.shape
    assert jnp.allclose(out, ref, atol=1e-4, rtol=1e-4), float(jnp.max(jnp.abs(out - ref)))
    print("KERNEL_OK")
</pallas_src>

<mosaic_0001>
module attributes {stable_mosaic.version = 11 : i64} {
  func.func @_lstm_fc_kernel(%arg0: memref<8x64xf32, #tpu.memory_space<vmem>>, %arg1: memref<704x128xf32, #tpu.memory_space<vmem>>, %arg2: memref<4x128xf32, #tpu.memory_space<vmem>>, %arg3: memref<8x128xf32, #tpu.memory_space<vmem>>, %arg4: memref<8x128xf32, #tpu.memory_space<vmem>>) attributes {dimension_semantics = [], scalar_prefetch = 0 : i64, scratch_operands = 1 : i64, tpu.core_type = #tpu.core_type<tc>} {
    %c0 = arith.constant 0 : index
    %c0_0 = arith.constant 0 : index
    %0 = vector.load %arg2[%c0, %c0_0] : memref<4x128xf32, #tpu.memory_space<vmem>>, vector<1x128xf32>
    %c1 = arith.constant 1 : index
    %c0_1 = arith.constant 0 : index
    %1 = vector.load %arg2[%c1, %c0_1] : memref<4x128xf32, #tpu.memory_space<vmem>>, vector<1x128xf32>
    %c2 = arith.constant 2 : index
    %c0_2 = arith.constant 0 : index
    %2 = vector.load %arg2[%c2, %c0_2] : memref<4x128xf32, #tpu.memory_space<vmem>>, vector<1x128xf32>
    %c3 = arith.constant 3 : index
    %c0_3 = arith.constant 0 : index
    %3 = vector.load %arg2[%c3, %c0_3] : memref<4x128xf32, #tpu.memory_space<vmem>>, vector<1x128xf32>
    %c0_4 = arith.constant 0 : index
    %c0_5 = arith.constant 0 : index
    %4 = vector.load %arg0[%c0_4, %c0_5] : memref<8x64xf32, #tpu.memory_space<vmem>>, vector<8x64xf32>
    %c0_6 = arith.constant 0 : index
    %c0_7 = arith.constant 0 : index
    %5 = vector.load %arg1[%c0_6, %c0_7] : memref<704x128xf32, #tpu.memory_space<vmem>>, vector<64x128xf32>
    %cst = arith.constant dense<0.000000e+00> : vector<8x128xf32>
    %6 = tpu.matmul %4, %5, %cst {dimension_numbers = #tpu.dot_dimension_numbers<[1], [0], [0], [1], [0, 0, 1, 1], [], []>} : vector<8x64xf32>, vector<64x128xf32>, vector<8x128xf32> -> vector<8x128xf32>
    %7 = vector.broadcast %0 : vector<1x128xf32> to vector<8x128xf32>
    %8 = arith.addf %6, %7 : vector<8x128xf32>
    %c0_8 = arith.constant 0 : index
    %c0_9 = arith.constant 0 : index
    %9 = vector.load %arg4[%c0_8, %c0_9] : memref<8x128xf32, #tpu.memory_space<vmem>>, vector<8x128xf32>
    tpu.vector_store %arg4[%c0_8, %c0_9], %8 {strides = array<i32>} : memref<8x128xf32, #tpu.memory_space<vmem>>, vector<8x128xf32>,
    %cst_10 = arith.constant 0.000000e+00 : f32
    %10 = vector.broadcast %cst_10 : f32 to vector<1x128xf32>
    %c0_11 = arith.constant 0 : index
    %c0_12 = arith.constant 0 : index
    %11 = vector.load %arg4[%c0_11, %c0_12] : memref<8x128xf32, #tpu.memory_space<vmem>>, vector<1x128xf32>
    %c64 = arith.constant 64 : index
    %c0_13 = arith.constant 0 : index
    %12 = vector.load %arg1[%c64, %c0_13] : memref<704x128xf32, #tpu.memory_space<vmem>>, vector<128x128xf32>
    %cst_14 = arith.constant dense<0.000000e+00> : vector<1x128xf32>
    %13 = tpu.matmul %10, %12, %cst_14 {dimension_numbers = #tpu.dot_dimension_numbers<[1], [0], [0], [1], [0, 0, 1, 1], [], []>} : vector<1x128xf32>, vector<128x128xf32>, vector<1x128xf32> -> vector<1x128xf32>
    %14 = arith.addf %11, %13 : vector<1x128xf32>
    %15 = arith.negf %14 : vector<1x128xf32>
    %16 = math.exp %15 : vector<1x128xf32>
    %cst_15 = arith.constant 1.000000e+00 : f32
    %17 = vector.broadcast %cst_15 : f32 to vector<1x128xf32>
    %18 = arith.addf %17, %16 : vector<1x128xf32>
    %19 = arith.divf %17, %18 : vector<1x128xf32>
    %20 = math.tanh %14 : vector<1x128xf32>
    %c96_i32 = arith.constant 96 : i32
    %21 = tpu.dynamic_rotate %19 by %c96_i32 dim 1 : vector<1x128xf32>, i32 -> vector<1x128xf32>
    %c64_i32 = arith.constant 64 : i32
    %22 = tpu.dynamic_rotate %20 by %c64_i32 dim 1 : vector<1x128xf32>, i32 -> vector<1x128xf32>
    %c32_i32 = arith.constant 32 : i32
    %23 = tpu.dynamic_rotate %19 by %c32_i32 dim 1 : vector<1x128xf32>, i32 -> vector<1x128xf32>
    %24 = arith.mulf %21, %10 : vector<1x128xf32>
    %25 = arith.mulf %19, %22 : vector<1x128xf32>
    %26 = arith.addf %24, %25 : vector<1x128xf32>
    %27 = math.tanh %26 : vector<1x128xf32>
    %28 = arith.mulf %23, %27 : vector<1x128xf32>
    %c192 = arith.constant 192 : index
    %c0_16 = arith.constant 0 : index
    %29 = vector.load %arg1[%c192, %c0_16] : memref<704x128xf32, #tpu.memory_space<vmem>>, vector<128x128xf32>
    %cst_17 = arith.constant dense<0.000000e+00> : vector<1x128xf32>
    %30 = tpu.matmul %28, %29, %cst_17 {dimension_numbers = #tpu.dot_dimension_numbers<[1], [0], [0], [1], [0, 0, 1, 1], [], []>} : vector<1x128xf32>, vector<128x128xf32>, vector<1x128xf32> -> vector<1x128xf32>
    %31 = arith.addf %1, %30 : vector<1x128xf32>
    %32 = arith.negf %31 : vector<1x128xf32>
    %33 = math.exp %32 : vector<1x128xf32>
    %cst_18 = arith.constant 1.000000e+00 : f32
    %34 = vector.broadcast %cst_18 : f32 to vector<1x128xf32>
    %35 = arith.addf %34, %33 : vector<1x128xf32>
    %36 = arith.divf %34, %35 : vector<1x128xf32>
    %37 = math.tanh %31 : vector<1x128xf32>
    %c96_i32_19 = arith.constant 96 : i32
    %38 = tpu.dynamic_rotate %36 by %c96_i32_19 dim 1 : vector<1x128xf32>, i32 -> vector<1x128xf32>
    %c64_i32_20 = arith.constant 64 : i32
    %39 = tpu.dynamic_rotate %37 by %c64_i32_20 dim 1 : vector<1x128xf32>, i32 -> vector<1x128xf32>
    %c32_i32_21 = arith.constant 32 : i32
    %40 = tpu.dynamic_rotate %36 by %c32_i32_21 dim 1 : vector<1x128xf32>, i32 -> vector<1x128xf32>
    %41 = arith.mulf %38, %10 : vector<1x128xf32>
    %42 = arith.mulf %36, %39 : vector<1x128xf32>
    %43 = arith.addf %41, %42 : vector<1x128xf32>
    %44 = math.tanh %43 : vector<1x128xf32>
    %45 = arith.mulf %40, %44 : vector<1x128xf32>
    %c320 = arith.constant 320 : index
    %c0_22 = arith.constant 0 : index
    %46 = vector.load %arg1[%c320, %c0_22] : memref<704x128xf32, #tpu.memory_space<vmem>>, vector<128x128xf32>
    %cst_23 = arith.constant dense<0.000000e+00> : vector<1x128xf32>
    %47 = tpu.matmul %45, %46, %cst_23 {dimension_numbers = #tpu.dot_dimension_numbers<[1], [0], [0], [1], [0, 0, 1, 1], [], []>} : vector<1x128xf32>, vector<128x128xf32>, vector<1x128xf32> -> vector<1x128xf32>
    %48 = arith.addf %1, %47 : vector<1x128xf32>
    %c1_24 = arith.constant 1 : index
    %c0_25 = arith.constant 0 : index
    %49 = vector.load %arg4[%c1_24, %c0_25] : memref<8x128xf32, #tpu.memory_space<vmem>>, vector<1x128xf32>
    %c64_26 = arith.constant 64 : index
    %c0_27 = arith.constant 0 : index
    %50 = vector.load %arg1[%c64_26, %c0_27] : memref<704x128xf32, #tpu.memory_space<vmem>>, vector<128x128xf32>
    %cst_28 = arith.constant dense<0.000000e+00> : vector<1x128xf32>
    %51 = tpu.matmul %28, %50, %cst_28 {dimension_numbers = #tpu.dot_dimension_numbers<[1], [0], [0], [1], [0, 0, 1, 1], [], []>} : vector<1x128xf32>, vector<128x128xf32>, vector<1x128xf32> -> vector<1x128xf32>
    %52 = arith.addf %49, %51 : vector<1x128xf32>
    %53 = arith.negf %52 : vector<1x128xf32>
    %54 = math.exp %53 : vector<1x128xf32>
    %cst_29 = arith.constant 1.000000e+00 : f32
    %55 = vector.broadcast %cst_29 : f32 to vector<1x128xf32>
    %56 = arith.addf %55, %54 : vector<1x128xf32>
    %57 = arith.divf %55, %56 : vector<1x128xf32>
    %58 = math.tanh %52 : vector<1x128xf32>
    %c96_i32_30 = arith.constant 96 : i32
    %59 = tpu.dynamic_rotate %57 by %c96_i32_30 dim 1 : vector<1x128xf32>, i32 -> vector<1x128xf32>
    %c64_i32_31 = arith.constant 64 : i32
    %60 = tpu.dynamic_rotate %58 by %c64_i32_31 dim 1 : vector<1x128xf32>, i32 -> vector<1x128xf32>
    %c32_i32_32 = arith.constant 32 : i32
    %61 = tpu.dynamic_rotate %57 by %c32_i32_32 dim 1 : vector<1x128xf32>, i32 -> vector<1x128xf32>
    %62 = arith.mulf %59, %26 : vector<1x128xf32>
    %63 = arith.mulf %57, %60 : vector<1x128xf32>
    %64 = arith.addf %62, %63 : vector<1x128xf32>
    %65 = math.tanh %64 : vector<1x128xf32>
    %66 = arith.mulf %61, %65 : vector<1x128xf32>
    %c192_33 = arith.constant 192 : index
    %c0_34 = arith.constant 0 : index
    %67 = vector.load %arg1[%c192_33, %c0_34] : memref<704x128xf32, #tpu.memory_space<vmem>>, vector<128x128xf32>
    %cst_35 = arith.constant dense<0.000000e+00> : vector<1x128xf32>
    %68 = tpu.matmul %66, %67, %cst_35 {dimension_numbers = #tpu.dot_dimension_numbers<[1], [0], [0], [1], [0, 0, 1, 1], [], []>} : vector<1x128xf32>, vector<128x128xf32>, vector<1x128xf32> -> vector<1x128xf32>
    %69 = arith.addf %48, %68 : vector<1x128xf32>
    %70 = arith.negf %69 : vector<1x128xf32>
    %71 = math.exp %70 : vector<1x128xf32>
    %cst_36 = arith.constant 1.000000e+00 : f32
    %72 = vector.broadcast %cst_36 : f32 to vector<1x128xf32>
    %73 = arith.addf %72, %71 : vector<1x128xf32>
    %74 = arith.divf %72, %73 : vector<1x128xf32>
    %75 = math.tanh %69 : vector<1x128xf32>
    %c96_i32_37 = arith.constant 96 : i32
    %76 = tpu.dynamic_rotate %74 by %c96_i32_37 dim 1 : vector<1x128xf32>, i32 -> vector<1x128xf32>
    %c64_i32_38 = arith.constant 64 : i32
    %77 = tpu.dynamic_rotate %75 by %c64_i32_38 dim 1 : vector<1x128xf32>, i32 -> vector<1x128xf32>
    %c32_i32_39 = arith.constant 32 : i32
    %78 = tpu.dynamic_rotate %74 by %c32_i32_39 dim 1 : vector<1x128xf32>, i32 -> vector<1x128xf32>
    %79 = arith.mulf %76, %43 : vector<1x128xf32>
    %80 = arith.mulf %74, %77 : vector<1x128xf32>
    %81 = arith.addf %79, %80 : vector<1x128xf32>
    %82 = math.tanh %81 : vector<1x128xf32>
    %83 = arith.mulf %78, %82 : vector<1x128xf32>
    %c320_40 = arith.constant 320 : index
    %c0_41 = arith.constant 0 : index
    %84 = vector.load %arg1[%c320_40, %c0_41] : memref<704x128xf32, #tpu.memory_space<vmem>>, vector<128x128xf32>
    %cst_42 = arith.constant dense<0.000000e+00> : vector<1x128xf32>
    %85 = tpu.matmul %83, %84, %cst_42 {dimension_numbers = #tpu.dot_dimension_numbers<[1], [0], [0], [1], [0, 0, 1, 1], [], []>} : vector<1x128xf32>, vector<128x128xf32>, vector<1x128xf32> -> vector<1x128xf32>
    %86 = arith.addf %1, %85 : vector<1x128xf32>
    %c2_43 = arith.constant 2 : index
    %c0_44 = arith.constant 0 : index
    %87 = vector.load %arg4[%c2_43, %c0_44] : memref<8x128xf32, #tpu.memory_space<vmem>>, vector<1x128xf32>
    %c64_45 = arith.constant 64 : index
    %c0_46 = arith.constant 0 : index
    %88 = vector.load %arg1[%c64_45, %c0_46] : memref<704x128xf32, #tpu.memory_space<vmem>>, vector<128x128xf32>
    %cst_47 = arith.constant dense<0.000000e+00> : vector<1x128xf32>
    %89 = tpu.matmul %66, %88, %cst_47 {dimension_numbers = #tpu.dot_dimension_numbers<[1], [0], [0], [1], [0, 0, 1, 1], [], []>} : vector<1x128xf32>, vector<128x128xf32>, vector<1x128xf32> -> vector<1x128xf32>
    %90 = arith.addf %87, %89 : vector<1x128xf32>
    %91 = arith.negf %90 : vector<1x128xf32>
    %92 = math.exp %91 : vector<1x128xf32>
    %cst_48 = arith.constant 1.000000e+00 : f32
    %93 = vector.broadcast %cst_48 : f32 to vector<1x128xf32>
    %94 = arith.addf %93, %92 : vector<1x128xf32>
    %95 = arith.divf %93, %94 : vector<1x128xf32>
    %96 = math.tanh %90 : vector<1x128xf32>
    %c96_i32_49 = arith.constant 96 : i32
    %97 = tpu.dynamic_rotate %95 by %c96_i32_49 dim 1 : vector<1x128xf32>, i32 -> vector<1x128xf32>
    %c64_i32_50 = arith.constant 64 : i32
    %98 = tpu.dynamic_rotate %96 by %c64_i32_50 dim 1 : vector<1x128xf32>, i32 -> vector<1x128xf32>
    %c32_i32_51 = arith.constant 32 : i32
    %99 = tpu.dynamic_rotate %95 by %c32_i32_51 dim 1 : vector<1x128xf32>, i32 -> vector<1x128xf32>
    %100 = arith.mulf %97, %64 : vector<1x128xf32>
    %101 = arith.mulf %95, %98 : vector<1x128xf32>
    %102 = arith.addf %100, %101 : vector<1x128xf32>
    %103 = math.tanh %102 : vector<1x128xf32>
    %104 = arith.mulf %99, %103 : vector<1x128xf32>
    %c192_52 = arith.constant 192 : index
    %c0_53 = arith.constant 0 : index
    %105 = vector.load %arg1[%c192_52, %c0_53] : memref<704x128xf32, #tpu.memory_space<vmem>>, vector<128x128xf32>
    %cst_54 = arith.constant dense<0.000000e+00> : vector<1x128xf32>
    %106 = tpu.matmul %104, %105, %cst_54 {dimension_numbers = #tpu.dot_dimension_numbers<[1], [0], [0], [1], [0, 0, 1, 1], [], []>} : vector<1x128xf32>, vector<128x128xf32>, vector<1x128xf32> -> vector<1x128xf32>
    %107 = arith.addf %86, %106 : vector<1x128xf32>
    %108 = arith.negf %107 : vector<1x128xf32>
    %109 = math.exp %108 : vector<1x128xf32>
    %cst_55 = arith.constant 1.000000e+00 : f32
    %110 = vector.broadcast %cst_55 : f32 to vector<1x128xf32>
    %111 = arith.addf %110, %109 : vector<1x128xf32>
    %112 = arith.divf %110, %111 : vector<1x128xf32>
    %113 = math.tanh %107 : vector<1x128xf32>
    %c96_i32_56 = arith.constant 96 : i32
    %114 = tpu.dynamic_rotate %112 by %c96_i32_56 dim 1 : vector<1x128xf32>, i32 -> vector<1x128xf32>
    %c64_i32_57 = arith.constant 64 : i32
    %115 = tpu.dynamic_rotate %113 by %c64_i32_57 dim 1 : vector<1x128xf32>, i32 -> vector<1x128xf32>
    %c32_i32_58 = arith.constant 32 : i32
    %116 = tpu.dynamic_rotate %112 by %c32_i32_58 dim 1 : vector<1x128xf32>, i32 -> vector<1x128xf32>
    %117 = arith.mulf %114, %81 : vector<1x128xf32>
    %118 = arith.mulf %112, %115 : vector<1x128xf32>
    %119 = arith.addf %117, %118 : vector<1x128xf32>
    %120 = math.tanh %119 : vector<1x128xf32>
    %121 = arith.mulf %116, %120 : vector<1x128xf32>
    %c320_59 = arith.constant 320 : index
    %c0_60 = arith.constant 0 : index
    %122 = vector.load %arg1[%c320_59, %c0_60] : memref<704x128xf32, #tpu.memory_space<vmem>>, vector<128x128xf32>
    %cst_61 = arith.constant dense<0.000000e+00> : vector<1x128xf32>
    %123 = tpu.matmul %121, %122, %cst_61 {dimension_numbers = #tpu.dot_dimension_numbers<[1], [0], [0], [1], [0, 0, 1, 1], [], []>} : vector<1x128xf32>, vector<128x128xf32>, vector<1x128xf32> -> vector<1x128xf32>
    %124 = arith.addf %1, %123 : vector<1x128xf32>
    %c3_62 = arith.constant 3 : index
    %c0_63 = arith.constant 0 : index
    %125 = vector.load %arg4[%c3_62, %c0_63] : memref<8x128xf32, #tpu.memory_space<vmem>>, vector<1x128xf32>
    %c64_64 = arith.constant 64 : index
    %c0_65 = arith.constant 0 : index
    %126 = vector.load %arg1[%c64_64, %c0_65] : memref<704x128xf32, #tpu.memory_space<vmem>>, vector<128x128xf32>
    %cst_66 = arith.constant dense<0.000000e+00> : vector<1x128xf32>
    %127 = tpu.matmul %104, %126, %cst_66 {dimension_numbers = #tpu.dot_dimension_numbers<[1], [0], [0], [1], [0, 0, 1, 1], [], []>} : vector<1x128xf32>, vector<128x128xf32>, vector<1x128xf32> -> vector<1x128xf32>
    %128 = arith.addf %125, %127 : vector<1x128xf32>
    %129 = arith.negf %128 : vector<1x128xf32>
    %130 = math.exp %129 : vector<1x128xf32>
    %cst_67 = arith.constant 1.000000e+00 : f32
    %131 = vector.broadcast %cst_67 : f32 to vector<1x128xf32>
    %132 = arith.addf %131, %130 : vector<1x128xf32>
    %133 = arith.divf %131, %132 : vector<1x128xf32>
    %134 = math.tanh %128 : vector<1x128xf32>
    %c96_i32_68 = arith.constant 96 : i32
    %135 = tpu.dynamic_rotate %133 by %c96_i32_68 dim 1 : vector<1x128xf32>, i32 -> vector<1x128xf32>
    %c64_i32_69 = arith.constant 64 : i32
    %136 = tpu.dynamic_rotate %134 by %c64_i32_69 dim 1 : vector<1x128xf32>, i32 -> vector<1x128xf32>
    %c32_i32_70 = arith.constant 32 : i32
    %137 = tpu.dynamic_rotate %133 by %c32_i32_70 dim 1 : vector<1x128xf32>, i32 -> vector<1x128xf32>
    %138 = arith.mulf %135, %102 : vector<1x128xf32>
    %139 = arith.mulf %133, %136 : vector<1x128xf32>
    %140 = arith.addf %138, %139 : vector<1x128xf32>
    %141 = math.tanh %140 : vector<1x128xf32>
    %142 = arith.mulf %137, %141 : vector<1x128xf32>
    %c192_71 = arith.constant 192 : index
    %c0_72 = arith.constant 0 : index
    %143 = vector.load %arg1[%c192_71, %c0_72] : memref<704x128xf32, #tpu.memory_space<vmem>>, vector<128x128xf32>
    %cst_73 = arith.constant dense<0.000000e+00> : vector<1x128xf32>
    %144 = tpu.matmul %142, %143, %cst_73 {dimension_numbers = #tpu.dot_dimension_numbers<[1], [0], [0], [1], [0, 0, 1, 1], [], []>} : vector<1x128xf32>, vector<128x128xf32>, vector<1x128xf32> -> vector<1x128xf32>
    %145 = arith.addf %124, %144 : vector<1x128xf32>
    %146 = arith.negf %145 : vector<1x128xf32>
    %147 = math.exp %146 : vector<1x128xf32>
    %cst_74 = arith.constant 1.000000e+00 : f32
    %148 = vector.broadcast %cst_74 : f32 to vector<1x128xf32>
    %149 = arith.addf %148, %147 : vector<1x128xf32>
    %150 = arith.divf %148, %149 : vector<1x128xf32>
    %151 = math.tanh %145 : vector<1x128xf32>
    %c96_i32_75 = arith.constant 96 : i32
    %152 = tpu.dynamic_rotate %150 by %c96_i32_75 dim 1 : vector<1x128xf32>, i32 -> vector<1x128xf32>
    %c64_i32_76 = arith.constant 64 : i32
    %153 = tpu.dynamic_rotate %151 by %c64_i32_76 dim 1 : vector<1x128xf32>, i32 -> vector<1x128xf32>
    %c32_i32_77 = arith.constant 32 : i32
    %154 = tpu.dynamic_rotate %150 by %c32_i32_77 dim 1 : vector<1x128xf32>, i32 -> vector<1x128xf32>
    %155 = arith.mulf %152, %119 : vector<1x128xf32>
    %156 = arith.mulf %150, %153 : vector<1x128xf32>
    %157 = arith.addf %155, %156 : vector<1x128xf32>
    %158 = math.tanh %157 : vector<1x128xf32>
    %159 = arith.mulf %154, %158 : vector<1x128xf32>
    %c320_78 = arith.constant 320 : index
    %c0_79 = arith.constant 0 : index
    %160 = vector.load %arg1[%c320_78, %c0_79] : memref<704x128xf32, #tpu.memory_space<vmem>>, vector<128x128xf32>
    %cst_80 = arith.constant dense<0.000000e+00> : vector<1x128xf32>
    %161 = tpu.matmul %159, %160, %cst_80 {dimension_numbers = #tpu.dot_dimension_numbers<[1], [0], [0], [1], [0, 0, 1, 1], [], []>} : vector<1x128xf32>, vector<128x128xf32>, vector<1x128xf32> -> vector<1x128xf32>
    %162 = arith.addf %1, %161 : vector<1x128xf32>
    %c4 = arith.constant 4 : index
    %c0_81 = arith.constant 0 : index
    %163 = vector.load %arg4[%c4, %c0_81] : memref<8x128xf32, #tpu.memory_space<vmem>>, vector<1x128xf32>
    %c64_82 = arith.constant 64 : index
    %c0_83 = arith.constant 0 : index
    %164 = vector.load %arg1[%c64_82, %c0_83] : memref<704x128xf32, #tpu.memory_space<vmem>>, vector<128x128xf32>
    %cst_84 = arith.constant dense<0.000000e+00> : vector<1x128xf32>
    %165 = tpu.matmul %142, %164, %cst_84 {dimension_numbers = #tpu.dot_dimension_numbers<[1], [0], [0], [1], [0, 0, 1, 1], [], []>} : vector<1x128xf32>, vector<128x128xf32>, vector<1x128xf32> -> vector<1x128xf32>
    %166 = arith.addf %163, %165 : vector<1x128xf32>
    %167 = arith.negf %166 : vector<1x128xf32>
    %168 = math.exp %167 : vector<1x128xf32>
    %cst_85 = arith.constant 1.000000e+00 : f32
    %169 = vector.broadcast %cst_85 : f32 to vector<1x128xf32>
    %170 = arith.addf %169, %168 : vector<1x128xf32>
    %171 = arith.divf %169, %170 : vector<1x128xf32>
    %172 = math.tanh %166 : vector<1x128xf32>
    %c96_i32_86 = arith.constant 96 : i32
    %173 = tpu.dynamic_rotate %171 by %c96_i32_86 dim 1 : vector<1x128xf32>, i32 -> vector<1x128xf32>
    %c64_i32_87 = arith.constant 64 : i32
    %174 = tpu.dynamic_rotate %172 by %c64_i32_87 dim 1 : vector<1x128xf32>, i32 -> vector<1x128xf32>
    %c32_i32_88 = arith.constant 32 : i32
    %175 = tpu.dynamic_rotate %171 by %c32_i32_88 dim 1 : vector<1x128xf32>, i32 -> vector<1x128xf32>
    %176 = arith.mulf %173, %140 : vector<1x128xf32>
    %177 = arith.mulf %171, %174 : vector<1x128xf32>
    %178 = arith.addf %176, %177 : vector<1x128xf32>
    %179 = math.tanh %178 : vector<1x128xf32>
    %180 = arith.mulf %175, %179 : vector<1x128xf32>
    %c192_89 = arith.constant 192 : index
    %c0_90 = arith.constant 0 : index
    %181 = vector.load %arg1[%c192_89, %c0_90] : memref<704x128xf32, #tpu.memory_space<vmem>>, vector<128x128xf32>
    %cst_91 = arith.constant dense<0.000000e+00> : vector<1x128xf32>
    %182 = tpu.matmul %180, %181, %cst_91 {dimension_numbers = #tpu.dot_dimension_numbers<[1], [0], [0], [1], [0, 0, 1, 1], [], []>} : vector<1x128xf32>, vector<128x128xf32>, vector<1x128xf32> -> vector<1x128xf32>
    %183 = arith.addf %162, %182 : vector<1x128xf32>
    %184 = arith.negf %183 : vector<1x128xf32>
    %185 = math.exp %184 : vector<1x128xf32>
    %cst_92 = arith.constant 1.000000e+00 : f32
    %186 = vector.broadcast %cst_92 : f32 to vector<1x128xf32>
    %187 = arith.addf %186, %185 : vector<1x128xf32>
    %188 = arith.divf %186, %187 : vector<1x128xf32>
    %189 = math.tanh %183 : vector<1x128xf32>
    %c96_i32_93 = arith.constant 96 : i32
    %190 = tpu.dynamic_rotate %188 by %c96_i32_93 dim 1 : vector<1x128xf32>, i32 -> vector<1x128xf32>
    %c64_i32_94 = arith.constant 64 : i32
    %191 = tpu.dynamic_rotate %189 by %c64_i32_94 dim 1 : vector<1x128xf32>, i32 -> vector<1x128xf32>
    %c32_i32_95 = arith.constant 32 : i32
    %192 = tpu.dynamic_rotate %188 by %c32_i32_95 dim 1 : vector<1x128xf32>, i32 -> vector<1x128xf32>
    %193 = arith.mulf %190, %157 : vector<1x128xf32>
    %194 = arith.mulf %188, %191 : vector<1x128xf32>
    %195 = arith.addf %193, %194 : vector<1x128xf32>
    %196 = math.tanh %195 : vector<1x128xf32>
    %197 = arith.mulf %192, %196 : vector<1x128xf32>
    %c320_96 = arith.constant 320 : index
    %c0_97 = arith.constant 0 : index
    %198 = vector.load %arg1[%c320_96, %c0_97] : memref<704x128xf32, #tpu.memory_space<vmem>>, vector<128x128xf32>
    %cst_98 = arith.constant dense<0.000000e+00> : vector<1x128xf32>
    %199 = tpu.matmul %197, %198, %cst_98 {dimension_numbers = #tpu.dot_dimension_numbers<[1], [0], [0], [1], [0, 0, 1, 1], [], []>} : vector<1x128xf32>, vector<128x128xf32>, vector<1x128xf32> -> vector<1x128xf32>
    %200 = arith.addf %1, %199 : vector<1x128xf32>
    %c5 = arith.constant 5 : index
    %c0_99 = arith.constant 0 : index
    %201 = vector.load %arg4[%c5, %c0_99] : memref<8x128xf32, #tpu.memory_space<vmem>>, vector<1x128xf32>
    %c64_100 = arith.constant 64 : index
    %c0_101 = arith.constant 0 : index
    %202 = vector.load %arg1[%c64_100, %c0_101] : memref<704x128xf32, #tpu.memory_space<vmem>>, vector<128x128xf32>
    %cst_102 = arith.constant dense<0.000000e+00> : vector<1x128xf32>
    %203 = tpu.matmul %180, %202, %cst_102 {dimension_numbers = #tpu.dot_dimension_numbers<[1], [0], [0], [1], [0, 0, 1, 1], [], []>} : vector<1x128xf32>, vector<128x128xf32>, vector<1x128xf32> -> vector<1x128xf32>
    %204 = arith.addf %201, %203 : vector<1x128xf32>
    %205 = arith.negf %204 : vector<1x128xf32>
    %206 = math.exp %205 : vector<1x128xf32>
    %cst_103 = arith.constant 1.000000e+00 : f32
    %207 = vector.broadcast %cst_103 : f32 to vector<1x128xf32>
    %208 = arith.addf %207, %206 : vector<1x128xf32>
    %209 = arith.divf %207, %208 : vector<1x128xf32>
    %210 = math.tanh %204 : vector<1x128xf32>
    %c96_i32_104 = arith.constant 96 : i32
    %211 = tpu.dynamic_rotate %209 by %c96_i32_104 dim 1 : vector<1x128xf32>, i32 -> vector<1x128xf32>
    %c64_i32_105 = arith.constant 64 : i32
    %212 = tpu.dynamic_rotate %210 by %c64_i32_105 dim 1 : vector<1x128xf32>, i32 -> vector<1x128xf32>
    %c32_i32_106 = arith.constant 32 : i32
    %213 = tpu.dynamic_rotate %209 by %c32_i32_106 dim 1 : vector<1x128xf32>, i32 -> vector<1x128xf32>
    %214 = arith.mulf %211, %178 : vector<1x128xf32>
    %215 = arith.mulf %209, %212 : vector<1x128xf32>
    %216 = arith.addf %214, %215 : vector<1x128xf32>
    %217 = math.tanh %216 : vector<1x128xf32>
    %218 = arith.mulf %213, %217 : vector<1x128xf32>
    %c192_107 = arith.constant 192 : index
    %c0_108 = arith.constant 0 : index
    %219 = vector.load %arg1[%c192_107, %c0_108] : memref<704x128xf32, #tpu.memory_space<vmem>>, vector<128x128xf32>
    %cst_109 = arith.constant dense<0.000000e+00> : vector<1x128xf32>
    %220 = tpu.matmul %218, %219, %cst_109 {dimension_numbers = #tpu.dot_dimension_numbers<[1], [0], [0], [1], [0, 0, 1, 1], [], []>} : vector<1x128xf32>, vector<128x128xf32>, vector<1x128xf32> -> vector<1x128xf32>
    %221 = arith.addf %200, %220 : vector<1x128xf32>
    %222 = arith.negf %221 : vector<1x128xf32>
    %223 = math.exp %222 : vector<1x128xf32>
    %cst_110 = arith.constant 1.000000e+00 : f32
    %224 = vector.broadcast %cst_110 : f32 to vector<1x128xf32>
    %225 = arith.addf %224, %223 : vector<1x128xf32>
    %226 = arith.divf %224, %225 : vector<1x128xf32>
    %227 = math.tanh %221 : vector<1x128xf32>
    %c96_i32_111 = arith.constant 96 : i32
    %228 = tpu.dynamic_rotate %226 by %c96_i32_111 dim 1 : vector<1x128xf32>, i32 -> vector<1x128xf32>
    %c64_i32_112 = arith.constant 64 : i32
    %229 = tpu.dynamic_rotate %227 by %c64_i32_112 dim 1 : vector<1x128xf32>, i32 -> vector<1x128xf32>
    %c32_i32_113 = arith.constant 32 : i32
    %230 = tpu.dynamic_rotate %226 by %c32_i32_113 dim 1 : vector<1x128xf32>, i32 -> vector<1x128xf32>
    %231 = arith.mulf %228, %195 : vector<1x128xf32>
    %232 = arith.mulf %226, %229 : vector<1x128xf32>
    %233 = arith.addf %231, %232 : vector<1x128xf32>
    %234 = math.tanh %233 : vector<1x128xf32>
    %235 = arith.mulf %230, %234 : vector<1x128xf32>
    %c320_114 = arith.constant 320 : index
    %c0_115 = arith.constant 0 : index
    %236 = vector.load %arg1[%c320_114, %c0_115] : memref<704x128xf32, #tpu.memory_space<vmem>>, vector<128x128xf32>
    %cst_116 = arith.constant dense<0.000000e+00> : vector<1x128xf32>
    %237 = tpu.matmul %235, %236, %cst_116 {dimension_numbers = #tpu.dot_dimension_numbers<[1], [0], [0], [1], [0, 0, 1, 1], [], []>} : vector<1x128xf32>, vector<128x128xf32>, vector<1x128xf32> -> vector<1x128xf32>
    %238 = arith.addf %1, %237 : vector<1x128xf32>
    %c6 = arith.constant 6 : index
    %c0_117 = arith.constant 0 : index
    %239 = vector.load %arg4[%c6, %c0_117] : memref<8x128xf32, #tpu.memory_space<vmem>>, vector<1x128xf32>
    %c64_118 = arith.constant 64 : index
    %c0_119 = arith.constant 0 : index
    %240 = vector.load %arg1[%c64_118, %c0_119] : memref<704x128xf32, #tpu.memory_space<vmem>>, vector<128x128xf32>
    %cst_120 = arith.constant dense<0.000000e+00> : vector<1x128xf32>
    %241 = tpu.matmul %218, %240, %cst_120 {dimension_numbers = #tpu.dot_dimension_numbers<[1], [0], [0], [1], [0, 0, 1, 1], [], []>} : vector<1x128xf32>, vector<128x128xf32>, vector<1x128xf32> -> vector<1x128xf32>
    %242 = arith.addf %239, %241 : vector<1x128xf32>
    %243 = arith.negf %242 : vector<1x128xf32>
    %244 = math.exp %243 : vector<1x128xf32>
    %cst_121 = arith.constant 1.000000e+00 : f32
    %245 = vector.broadcast %cst_121 : f32 to vector<1x128xf32>
    %246 = arith.addf %245, %244 : vector<1x128xf32>
    %247 = arith.divf %245, %246 : vector<1x128xf32>
    %248 = math.tanh %242 : vector<1x128xf32>
    %c96_i32_122 = arith.constant 96 : i32
    %249 = tpu.dynamic_rotate %247 by %c96_i32_122 dim 1 : vector<1x128xf32>, i32 -> vector<1x128xf32>
    %c64_i32_123 = arith.constant 64 : i32
    %250 = tpu.dynamic_rotate %248 by %c64_i32_123 dim 1 : vector<1x128xf32>, i32 -> vector<1x128xf32>
    %c32_i32_124 = arith.constant 32 : i32
    %251 = tpu.dynamic_rotate %247 by %c32_i32_124 dim 1 : vector<1x128xf32>, i32 -> vector<1x128xf32>
    %252 = arith.mulf %249, %216 : vector<1x128xf32>
    %253 = arith.mulf %247, %250 : vector<1x128xf32>
    %254 = arith.addf %252, %253 : vector<1x128xf32>
    %255 = math.tanh %254 : vector<1x128xf32>
    %256 = arith.mulf %251, %255 : vector<1x128xf32>
    %c192_125 = arith.constant 192 : index
    %c0_126 = arith.constant 0 : index
    %257 = vector.load %arg1[%c192_125, %c0_126] : memref<704x128xf32, #tpu.memory_space<vmem>>, vector<128x128xf32>
    %cst_127 = arith.constant dense<0.000000e+00> : vector<1x128xf32>
    %258 = tpu.matmul %256, %257, %cst_127 {dimension_numbers = #tpu.dot_dimension_numbers<[1], [0], [0], [1], [0, 0, 1, 1], [], []>} : vector<1x128xf32>, vector<128x128xf32>, vector<1x128xf32> -> vector<1x128xf32>
    %259 = arith.addf %238, %258 : vector<1x128xf32>
    %260 = arith.negf %259 : vector<1x128xf32>
    %261 = math.exp %260 : vector<1x128xf32>
    %cst_128 = arith.constant 1.000000e+00 : f32
    %262 = vector.broadcast %cst_128 : f32 to vector<1x128xf32>
    %263 = arith.addf %262, %261 : vector<1x128xf32>
    %264 = arith.divf %262, %263 : vector<1x128xf32>
    %265 = math.tanh %259 : vector<1x128xf32>
    %c96_i32_129 = arith.constant 96 : i32
    %266 = tpu.dynamic_rotate %264 by %c96_i32_129 dim 1 : vector<1x128xf32>, i32 -> vector<1x128xf32>
    %c64_i32_130 = arith.constant 64 : i32
    %267 = tpu.dynamic_rotate %265 by %c64_i32_130 dim 1 : vector<1x128xf32>, i32 -> vector<1x128xf32>
    %c32_i32_131 = arith.constant 32 : i32
    %268 = tpu.dynamic_rotate %264 by %c32_i32_131 dim 1 : vector<1x128xf32>, i32 -> vector<1x128xf32>
    %269 = arith.mulf %266, %233 : vector<1x128xf32>
    %270 = arith.mulf %264, %267 : vector<1x128xf32>
    %271 = arith.addf %269, %270 : vector<1x128xf32>
    %272 = math.tanh %271 : vector<1x128xf32>
    %273 = arith.mulf %268, %272 : vector<1x128xf32>
    %c320_132 = arith.constant 320 : index
    %c0_133 = arith.constant 0 : index
    %274 = vector.load %arg1[%c320_132, %c0_133] : memref<704x128xf32, #tpu.memory_space<vmem>>, vector<128x128xf32>
    %cst_134 = arith.constant dense<0.000000e+00> : vector<1x128xf32>
    %275 = tpu.matmul %273, %274, %cst_134 {dimension_numbers = #tpu.dot_dimension_numbers<[1], [0], [0], [1], [0, 0, 1, 1], [], []>} : vector<1x128xf32>, vector<128x128xf32>, vector<1x128xf32> -> vector<1x128xf32>
    %276 = arith.addf %1, %275 : vector<1x128xf32>
    %c7 = arith.constant 7 : index
    %c0_135 = arith.constant 0 : index
    %277 = vector.load %arg4[%c7, %c0_135] : memref<8x128xf32, #tpu.memory_space<vmem>>, vector<1x128xf32>
    %c64_136 = arith.constant 64 : index
    %c0_137 = arith.constant 0 : index
    %278 = vector.load %arg1[%c64_136, %c0_137] : memref<704x128xf32, #tpu.memory_space<vmem>>, vector<128x128xf32>
    %cst_138 = arith.constant dense<0.000000e+00> : vector<1x128xf32>
    %279 = tpu.matmul %256, %278, %cst_138 {dimension_numbers = #tpu.dot_dimension_numbers<[1], [0], [0], [1], [0, 0, 1, 1], [], []>} : vector<1x128xf32>, vector<128x128xf32>, vector<1x128xf32> -> vector<1x128xf32>
    %280 = arith.addf %277, %279 : vector<1x128xf32>
    %281 = arith.negf %280 : vector<1x128xf32>
    %282 = math.exp %281 : vector<1x128xf32>
    %cst_139 = arith.constant 1.000000e+00 : f32
    %283 = vector.broadcast %cst_139 : f32 to vector<1x128xf32>
    %284 = arith.addf %283, %282 : vector<1x128xf32>
    %285 = arith.divf %283, %284 : vector<1x128xf32>
    %286 = math.tanh %280 : vector<1x128xf32>
    %c96_i32_140 = arith.constant 96 : i32
    %287 = tpu.dynamic_rotate %285 by %c96_i32_140 dim 1 : vector<1x128xf32>, i32 -> vector<1x128xf32>
    %c64_i32_141 = arith.constant 64 : i32
    %288 = tpu.dynamic_rotate %286 by %c64_i32_141 dim 1 : vector<1x128xf32>, i32 -> vector<1x128xf32>
    %c32_i32_142 = arith.constant 32 : i32
    %289 = tpu.dynamic_rotate %285 by %c32_i32_142 dim 1 : vector<1x128xf32>, i32 -> vector<1x128xf32>
    %290 = arith.mulf %287, %254 : vector<1x128xf32>
    %291 = arith.mulf %285, %288 : vector<1x128xf32>
    %292 = arith.addf %290, %291 : vector<1x128xf32>
    %293 = math.tanh %292 : vector<1x128xf32>
    %294 = arith.mulf %289, %293 : vector<1x128xf32>
    %c192_143 = arith.constant 192 : index
    %c0_144 = arith.constant 0 : index
    %295 = vector.load %arg1[%c192_143, %c0_144] : memref<704x128xf32, #tpu.memory_space<vmem>>, vector<128x128xf32>
    %cst_145 = arith.constant dense<0.000000e+00> : vector<1x128xf32>
    %296 = tpu.matmul %294, %295, %cst_145 {dimension_numbers = #tpu.dot_dimension_numbers<[1], [0], [0], [1], [0, 0, 1, 1], [], []>} : vector<1x128xf32>, vector<128x128xf32>, vector<1x128xf32> -> vector<1x128xf32>
    %297 = arith.addf %276, %296 : vector<1x128xf32>
    %298 = arith.negf %297 : vector<1x128xf32>
    %299 = math.exp %298 : vector<1x128xf32>
    %cst_146 = arith.constant 1.000000e+00 : f32
    %300 = vector.broadcast %cst_146 : f32 to vector<1x128xf32>
    %301 = arith.addf %300, %299 : vector<1x128xf32>
    %302 = arith.divf %300, %301 : vector<1x128xf32>
    %303 = math.tanh %297 : vector<1x128xf32>
    %c96_i32_147 = arith.constant 96 : i32
    %304 = tpu.dynamic_rotate %302 by %c96_i32_147 dim 1 : vector<1x128xf32>, i32 -> vector<1x128xf32>
    %c64_i32_148 = arith.constant 64 : i32
    %305 = tpu.dynamic_rotate %303 by %c64_i32_148 dim 1 : vector<1x128xf32>, i32 -> vector<1x128xf32>
    %c32_i32_149 = arith.constant 32 : i32
    %306 = tpu.dynamic_rotate %302 by %c32_i32_149 dim 1 : vector<1x128xf32>, i32 -> vector<1x128xf32>
    %307 = arith.mulf %304, %271 : vector<1x128xf32>
    %308 = arith.mulf %302, %305 : vector<1x128xf32>
    %309 = arith.addf %307, %308 : vector<1x128xf32>
    %310 = math.tanh %309 : vector<1x128xf32>
    %311 = arith.mulf %306, %310 : vector<1x128xf32>
    %312 = tpu.concatenate %45, %83, %121, %159, %197, %235, %273, %311 in 0 : vector<1x128xf32>, vector<1x128xf32>, vector<1x128xf32>, vector<1x128xf32>, vector<1x128xf32>, vector<1x128xf32>, vector<1x128xf32>, vector<1x128xf32> -> vector<8x128xf32>
    %c448 = arith.constant 448 : index
    %c0_150 = arith.constant 0 : index
    %313 = vector.load %arg1[%c448, %c0_150] : memref<704x128xf32, #tpu.memory_space<vmem>>, vector<128x128xf32>
    %cst_151 = arith.constant dense<0.000000e+00> : vector<8x128xf32>
    %314 = tpu.matmul %312, %313, %cst_151 {dimension_numbers = #tpu.dot_dimension_numbers<[1], [0], [0], [1], [0, 0, 1, 1], [], []>} : vector<8x128xf32>, vector<128x128xf32>, vector<8x128xf32> -> vector<8x128xf32>
    %315 = vector.broadcast %2 : vector<1x128xf32> to vector<8x128xf32>
    %316 = arith.addf %314, %315 : vector<8x128xf32>
    %cst_152 = arith.constant 0.000000e+00 : f32
    %317 = vector.broadcast %cst_152 : f32 to vector<8x128xf32>
    %318 = arith.maximumf %316, %317 : vector<8x128xf32>
    %c576 = arith.constant 576 : index
    %c0_153 = arith.constant 0 : index
    %319 = vector.load %arg1[%c576, %c0_153] : memref<704x128xf32, #tpu.memory_space<vmem>>, vector<128x128xf32>
    %cst_154 = arith.constant dense<0.000000e+00> : vector<8x128xf32>
    %320 = tpu.matmul %318, %319, %cst_154 {dimension_numbers = #tpu.dot_dimension_numbers<[1], [0], [0], [1], [0, 0, 1, 1], [], []>} : vector<8x128xf32>, vector<128x128xf32>, vector<8x128xf32> -> vector<8x128xf32>
    %321 = vector.broadcast %3 : vector<1x128xf32> to vector<8x128xf32>
    %322 = arith.addf %320, %321 : vector<8x128xf32>
    %c0_155 = arith.constant 0 : index
    %c0_156 = arith.constant 0 : index
    %323 = vector.load %arg3[%c0_155, %c0_156] : memref<8x128xf32, #tpu.memory_space<vmem>>, vector<8x128xf32>
    tpu.vector_store %arg3[%c0_155, %c0_156], %322 {strides = array<i32>} : memref<8x128xf32, #tpu.memory_space<vmem>>, vector<8x128xf32>,
    return
  }
}

</mosaic_0001>

<llo_original>
// kernel: tpu_custom_call.1
$region0: #{tpu_custom_call.1}
  #allocation0 [shape = 'u32[]', space=smem, size = 0x4, offset = 0x4, fixed_abs, tag = 'smem constant byte address 0x4 - core index']
  #allocation1 [shape = 'u32[144,128]{1,0:T(1,128)}', space=vmem, size = 0x12000, scoped, tag = 'internal scratch']
  #allocation2 [shape = 'f32[8,128]{1,0:T(8,128)}', space=vmem, size = 0x1000, scoped, tag = 'scratch operand']
  %s0 = inlined_call_operand.hbm [shape: f32[8,64], index: 0, kind: input, shape index: {}]
  %s1 = inlined_call_operand.hbm [shape: f32[704,128], index: 1, kind: input, shape index: {}]
  %s2 = inlined_call_operand.hbm [shape: f32[4,128], index: 2, kind: input, shape index: {}]
  %s3 = inlined_call_operand.hbm [shape: f32[8,128], index: 3, kind: output, shape index: {}]
  %s4 = sld [smem:[#allocation0]]
  $region34: #{tpu_custom_call.1} parent=0
    _
  %s6 = ssub.s32 1, %s4
  %s7 = scalar_select 0, %s6, %s4
  $region1: #{tpu_custom_call.1} parent=0
    #allocation3 [shape = 'u8[4096]{0}', space=vmem, size = 0x1000, scoped, tag = 'input window, operand 0, single buffered']
    #allocation4 [shape = 's32[1]{0}', space=sflag, size = 0x4, scoped, tag = 'scoped memory for tpu_custom_call.1']
    #allocation5 [shape = 's32[1]{0}', space=sflag, size = 0x4, scoped, tag = 'scoped memory for tpu_custom_call.1']
    #allocation6 [shape = 'u8[360448]{0}', space=vmem, size = 0x58000, scoped, tag = 'input window, operand 1, single buffered']
    #allocation7 [shape = 's32[1]{0}', space=sflag, size = 0x4, scoped, tag = 'scoped memory for tpu_custom_call.1']
    #allocation8 [shape = 'u8[2048]{0}', space=vmem, size = 0x800, scoped, tag = 'input window, operand 2, single buffered']
    #allocation9 [shape = 'u8[4096]{0}', space=vmem, size = 0x1000, scoped, tag = 'output window, operand 0, single buffered']
    %8 = vsyncpa [#allocation4], 0
    %9 = vsyncpa [#allocation7], 0
    %10 = vsyncpa [#allocation5], 0
    // Predicated region
    $region2: #{tpu_custom_call.1} parent=1 // pred_check
      _
    $region3: #{tpu_custom_call.1} parent=1 // pred_check_branch
      %12 = sbr.rel (0) target = $region5
    $region4: #{tpu_custom_call.1} parent=1 // pred_region
      %s14 = ssub.s32 128, 128
      %15 = vsyncadd [#allocation4], %s14
      %s17 = sshll.u32 [#allocation3], 4
      %s18 = int_to_ptr.vmem [resolvable:$true] %s17
      %20 = dma.hbm_to_vmem [thread:$0]  %s0, 128, %s18, [#allocation4]
    $region5: #{tpu_custom_call.1} parent=1 // pred_fallthru
      _
    // Predicated region
    $region6: #{tpu_custom_call.1} parent=1 // pred_check
      _
    $region7: #{tpu_custom_call.1} parent=1 // pred_check_branch
      %22 = sbr.rel (0) target = $region9
    $region8: #{tpu_custom_call.1} parent=1 // pred_region
      %s24 = ssub.s32 11264, 11264
      %25 = vsyncadd [#allocation7], %s24
      %s26 = sshll.u32 [#allocation6], 4
      %s27 = int_to_ptr.vmem [resolvable:$true] %s26
      %32 = dma.hbm_to_vmem [thread:$0]  %s1, 11264, %s27, [#allocation7], 128, 128, 8
    $region9: #{tpu_custom_call.1} parent=1 // pred_fallthru
      _
    // Predicated region
    $region10: #{tpu_custom_call.1} parent=1 // pred_check
      _
    $region11: #{tpu_custom_call.1} parent=1 // pred_check_branch
      %34 = sbr.rel (0) target = $region13
    $region12: #{tpu_custom_call.1} parent=1 // pred_region
      %s36 = ssub.s32 64, 64
      %37 = vsyncadd [#allocation7], %s36
      %s39 = sshll.u32 [#allocation8], 4
      %s40 = int_to_ptr.vmem [resolvable:$true] %s39
      %42 = dma.hbm_to_vmem [thread:$0]  %s2, 64, %s40, [#allocation7]
    $region13: #{tpu_custom_call.1} parent=1 // pred_fallthru
      _
    // Predicated region
    $region14: #{tpu_custom_call.1} parent=1 // pred_check
      _
    $region15: #{tpu_custom_call.1} parent=1 // pred_check_branch
      %44 = sbr.rel (0) target = $region17
    $region16: #{tpu_custom_call.1} parent=1 // pred_region
      %45 = dma.done [#allocation4], 128
    $region17: #{tpu_custom_call.1} parent=1 // pred_fallthru
      _
    // Predicated region
    $region18: #{tpu_custom_call.1} parent=1 // pred_check
      _
    $region19: #{tpu_custom_call.1} parent=1 // pred_check_branch
      %47 = sbr.rel (0) target = $region21
    $region20: #{tpu_custom_call.1} parent=1 // pred_region
      %48 = dma.done [#allocation7], 11264
    $region21: #{tpu_custom_call.1} parent=1 // pred_fallthru
      _
    // Predicated region
    $region22: #{tpu_custom_call.1} parent=1 // pred_check
      _
    $region23: #{tpu_custom_call.1} parent=1 // pred_check_branch
      %50 = sbr.rel (0) target = $region25
    $region24: #{tpu_custom_call.1} parent=1 // pred_region
      %51 = dma.done [#allocation7], 64
    $region25: #{tpu_custom_call.1} parent=1 // pred_fallthru
      _
    %v52 = vld [vmem:[#allocation8] sm:$0x1]
    %v53 = vld [vmem:[#allocation8 + $0x1] sm:$0x1]
    %v54 = vld [vmem:[#allocation8 + $0x2] sm:$0x1]
    %v55 = vld [vmem:[#allocation8 + $0x3] sm:$0x1]
    %v56 = vld [vmem:[#allocation3] sm:$0xff]
    %v57 = vld [vmem:[#allocation6] sm:$0xff]
    %v58 = vld [vmem:[#allocation6 + $0x8] sm:$0xff]
    %v59 = vld [vmem:[#allocation6 + $0x10] sm:$0xff]
    %v60 = vld [vmem:[#allocation6 + $0x18] sm:$0xff]
    %v61 = vld [vmem:[#allocation6 + $0x20] sm:$0xff]
    %v62 = vld [vmem:[#allocation6 + $0x28] sm:$0xff]
    %v63 = vld [vmem:[#allocation6 + $0x30] sm:$0xff]
    %v64 = vld [vmem:[#allocation6 + $0x38] sm:$0xff]
    %v65 = vlaneseq
    %v66 = vshrl.u32 %v65, 7
    %v67 = vsub.s32 0, %v66
    %v68 = vrot.slane %v52, %v67
    %vm69 = vcmask 523264
    %v71 = vsel %vm69, %v56, 0
    %73 = vmatprep.subr.mxu0 0.0
    %74 = vmatpush1.msra.mxu0 0.0
    %75 = vmatprep.subr.mxu0 0.0
    %76 = vmatpush1.msra.mxu0 0.0
    %77 = vmatprep.subr.mxu0 0.0
    %78 = vmatpush1.msra.mxu0 0.0
    %79 = vmatprep.subr.mxu0 0.0
    %80 = vmatpush1.msra.mxu0 0.0
    %81 = vmatprep.subr.mxu0 0.0
    %82 = vmatpush1.msra.mxu0 0.0
    %83 = vmatprep.subr.mxu0 0.0
    %84 = vmatpush1.msra.mxu0 0.0
    %85 = vmatprep.subr.mxu0 0.0
    %86 = vmatpush1.msra.mxu0 0.0
    %87 = vmatprep.subr.mxu0 0.0
    %88 = vmatpush1.msra.mxu0 0.0
    %89 = vmatprep.subr.mxu0 0.0
    %90 = vmatpush1.msra.mxu0 %v64
    %91 = vmatprep.subr.mxu0 0.0
    %92 = vmatpush1.msra.mxu0 %v63
    %93 = vmatprep.subr.mxu0 0.0
    %94 = vmatpush1.msra.mxu0 %v62
    %95 = vmatprep.subr.mxu0 0.0
    %96 = vmatpush1.msra.mxu0 %v61
    %97 = vmatprep.subr.mxu0 0.0
    %98 = vmatpush1.msra.mxu0 %v60
    %99 = vmatprep.subr.mxu0 0.0
    %100 = vmatpush1.msra.mxu0 %v59
    %101 = vmatprep.subr.mxu0 0.0
    %102 = vmatpush1.msra.mxu0 %v58
    %103 = vmatprep.subr.mxu0 0.0
    %104 = vmatpush1.msra.mxu0 %v57
    %105 = vmatprep.subr.mxu0 0.0
    %106 = vmatpush2.msra.mxu0 0.0
    %107 = vmatprep.subr.mxu0 0.0
    %108 = vmatpush2.msra.mxu0 0.0
    %109 = vmatprep.subr.mxu0 0.0
    %110 = vmatpush2.msra.mxu0 0.0
    %111 = vmatprep.subr.mxu0 0.0
    %112 = vmatpush2.msra.mxu0 0.0
    %113 = vmatprep.subr.mxu0 0.0
    %114 = vmatpush2.msra.mxu0 0.0
    %115 = vmatprep.subr.mxu0 0.0
    %116 = vmatpush2.msra.mxu0 0.0
    %117 = vmatprep.subr.mxu0 0.0
    %118 = vmatpush2.msra.mxu0 0.0
    %119 = vmatprep.subr.mxu0 0.0
    %120 = vmatpush2.msra.mxu0 0.0
    %121 = vmatprep.subr.mxu0 0.0
    %122 = vmatpush2.msra.mxu0 0.0
    %123 = vmatprep.subr.mxu0 0.0
    %124 = vmatpush2.msra.mxu0 0.0
    %125 = vmatprep.subr.mxu0 0.0
    %126 = vmatpush2.msra.mxu0 0.0
    %127 = vmatprep.subr.mxu0 0.0
    %128 = vmatpush2.msra.mxu0 0.0
    %129 = vmatprep.subr.mxu0 0.0
    %130 = vmatpush2.msra.mxu0 0.0
    %131 = vmatprep.subr.mxu0 0.0
    %132 = vmatpush2.msra.mxu0 0.0
    %133 = vmatprep.subr.mxu0 0.0
    %134 = vmatpush2.msra.mxu0 0.0
    %135 = vmatprep.subr.mxu0 0.0
    %136 = vmatpush2.msra.mxu0 0.0
    %137 = vmatprep.mubr.f32.mxu0 0.0
    %138 = vmatmul.mubr.f32.gmra.mxu0 %v71
    %v139 = vpop.f32.mrf.mxu0
    %v140 = vadd.f32 %v68, %v139
    %v141 = vpop.f32.mrf.mxu0
    %142 = vdwg.mxu0
    %143 = vst [vmem:[#allocation2] sm:$0xff] %v140
    %v144 = vld [vmem:[#allocation2] sm:$0x1]
    %v145 = vld [vmem:[#allocation6 + $0x40] sm:$0xff]
    %v146 = vld [vmem:[#allocation6 + $0x48] sm:$0xff]
    %v147 = vld [vmem:[#allocation6 + $0x50] sm:$0xff]
    %v148 = vld [vmem:[#allocation6 + $0x58] sm:$0xff]
    %v149 = vld [vmem:[#allocation6 + $0x60] sm:$0xff]
    %v150 = vld [vmem:[#allocation6 + $0x68] sm:$0xff]
    %v151 = vld [vmem:[#allocation6 + $0x70] sm:$0xff]
    %v152 = vld [vmem:[#allocation6 + $0x78] sm:$0xff]
    %v153 = vld [vmem:[#allocation6 + $0x80] sm:$0xff]
    %v154 = vld [vmem:[#allocation6 + $0x88] sm:$0xff]
    %v155 = vld [vmem:[#allocation6 + $0x90] sm:$0xff]
    %v156 = vld [vmem:[#allocation6 + $0x98] sm:$0xff]
    %v157 = vld [vmem:[#allocation6 + $0xa0] sm:$0xff]
    %v158 = vld [vmem:[#allocation6 + $0xa8] sm:$0xff]
    %v159 = vld [vmem:[#allocation6 + $0xb0] sm:$0xff]
    %v160 = vld [vmem:[#allocation6 + $0xb8] sm:$0xff]
    %161 = vmatprep.subr.mxu0 0.0
    %162 = vmatpush1.msra.mxu0 %v160
    %163 = vmatprep.subr.mxu0 0.0
    %164 = vmatpush1.msra.mxu0 %v159
    %165 = vmatprep.subr.mxu0 0.0
    %166 = vmatpush1.msra.mxu0 %v158
    %167 = vmatprep.subr.mxu0 0.0
    %168 = vmatpush1.msra.mxu0 %v157
    %169 = vmatprep.subr.mxu0 0.0
    %170 = vmatpush1.msra.mxu0 %v156
    %171 = vmatprep.subr.mxu0 0.0
    %172 = vmatpush1.msra.mxu0 %v155
    %173 = vmatprep.subr.mxu0 0.0
    %174 = vmatpush1.msra.mxu0 %v154
    %175 = vmatprep.subr.mxu0 0.0
    %176 = vmatpush1.msra.mxu0 %v153
    %177 = vmatprep.subr.mxu0 0.0
    %178 = vmatpush1.msra.mxu0 %v152
    %179 = vmatprep.subr.mxu0 0.0
    %180 = vmatpush1.msra.mxu0 %v151
    %181 = vmatprep.subr.mxu0 0.0
    %182 = vmatpush1.msra.mxu0 %v150
    %183 = vmatprep.subr.mxu0 0.0
    %184 = vmatpush1.msra.mxu0 %v149
    %185 = vmatprep.subr.mxu0 0.0
    %186 = vmatpush1.msra.mxu0 %v148
    %187 = vmatprep.subr.mxu0 0.0
    %188 = vmatpush1.msra.mxu0 %v147
    %189 = vmatprep.subr.mxu0 0.0
    %190 = vmatpush1.msra.mxu0 %v146
    %191 = vmatprep.subr.mxu0 0.0
    %192 = vmatpush1.msra.mxu0 %v145
    %193 = vmatprep.subr.mxu0 0.0
    %194 = vmatpush2.msra.mxu0 0.0
    %195 = vmatprep.subr.mxu0 0.0
    %196 = vmatpush2.msra.mxu0 0.0
    %197 = vmatprep.subr.mxu0 0.0
    %198 = vmatpush2.msra.mxu0 0.0
    %199 = vmatprep.subr.mxu0 0.0
    %200 = vmatpush2.msra.mxu0 0.0
    %201 = vmatprep.subr.mxu0 0.0
    %202 = vmatpush2.msra.mxu0 0.0
    %203 = vmatprep.subr.mxu0 0.0
    %204 = vmatpush2.msra.mxu0 0.0
    %205 = vmatprep.subr.mxu0 0.0
    %206 = vmatpush2.msra.mxu0 0.0
    %207 = vmatprep.subr.mxu0 0.0
    %208 = vmatpush2.msra.mxu0 0.0
    %209 = vmatprep.subr.mxu0 0.0
    %210 = vmatpush2.msra.mxu0 0.0
    %211 = vmatprep.subr.mxu0 0.0
    %212 = vmatpush2.msra.mxu0 0.0
    %213 = vmatprep.subr.mxu0 0.0
    %214 = vmatpush2.msra.mxu0 0.0
    %215 = vmatprep.subr.mxu0 0.0
    %216 = vmatpush2.msra.mxu0 0.0
    %217 = vmatprep.subr.mxu0 0.0
    %218 = vmatpush2.msra.mxu0 0.0
    %219 = vmatprep.subr.mxu0 0.0
    %220 = vmatpush2.msra.mxu0 0.0
    %221 = vmatprep.subr.mxu0 0.0
    %222 = vmatpush2.msra.mxu0 0.0
    %223 = vmatprep.subr.mxu0 0.0
    %224 = vmatpush2.msra.mxu0 0.0
    %225 = vmatprep.mubr.f32.mxu0 0.0
    %226 = vmatmul.mubr.f32.gmra.mxu0 0.0
    %v227 = vpop.f32.mrf.mxu0
    %v228 = vadd.f32 0.0, %v227
    %v229 = vpop.f32.mrf.mxu0
    %230 = vdwg.mxu0
    %v231 = vadd.f32 %v144, %v228
    %v232 = vxor.u32 %v231, 2147483648
    %v233 = vmul.f32 %v232, 1.442695
    %v234 = vpow.pop %v233
    %v235 = vadd.f32 %v234, 1.0
    %v236 = vrcp.pop %v235
    %v237 = vmul.f32 1.0, %v236
    %v238 = vtanh.pop %v231
    %239 = vrot.lane.b32.xlu0 %v237, 96
    %v240 = vpop.permute.xlu0 %239
    %241 = vrot.lane.b32.xlu0 %v238, 64
    %v242 = vpop.permute.xlu0 %241
    %243 = vrot.lane.b32.xlu0 %v237, 32
    %v244 = vpop.permute.xlu0 %243
    %v245 = vmul.f32 %v240, 0.0
    %v246 = vmul.f32 %v237, %v242
    %v247 = vadd.f32 %v245, %v246
    %v248 = vtanh.pop %v247
    %v249 = vmul.f32 %v244, %v248
    %v250 = vld [vmem:[#allocation6 + $0xc0] sm:$0xff]
    %v251 = vld [vmem:[#allocation6 + $0xc8] sm:$0xff]
    %v252 = vld [vmem:[#allocation6 + $0xd0] sm:$0xff]
    %v253 = vld [vmem:[#allocation6 + $0xd8] sm:$0xff]
    %v254 = vld [vmem:[#allocation6 + $0xe0] sm:$0xff]
    %v255 = vld [vmem:[#allocation6 + $0xe8] sm:$0xff]
    %v256 = vld [vmem:[#allocation6 + $0xf0] sm:$0xff]
    %v257 = vld [vmem:[#allocation6 + $0xf8] sm:$0xff]
    %v258 = vld [vmem:[#allocation6 + $0x100] sm:$0xff]
    %v259 = vld [vmem:[#allocation6 + $0x108] sm:$0xff]
    %v260 = vld [vmem:[#allocation6 + $0x110] sm:$0xff]
    %v261 = vld [vmem:[#allocation6 + $0x118] sm:$0xff]
    %v262 = vld [vmem:[#allocation6 + $0x120] sm:$0xff]
    %v263 = vld [vmem:[#allocation6 + $0x128] sm:$0xff]
    %v264 = vld [vmem:[#allocation6 + $0x130] sm:$0xff]
    %v265 = vld [vmem:[#allocation6 + $0x138] sm:$0xff]
    %266 = vmatprep.subr.mxu0 0.0
    %267 = vmatpush1.msra.mxu0 %v265
    %268 = vmatprep.subr.mxu0 0.0
    %269 = vmatpush1.msra.mxu0 %v264
    %270 = vmatprep.subr.mxu0 0.0
    %271 = vmatpush1.msra.mxu0 %v263
    %272 = vmatprep.subr.mxu0 0.0
    %273 = vmatpush1.msra.mxu0 %v262
    %274 = vmatprep.subr.mxu0 0.0
    %275 = vmatpush1.msra.mxu0 %v261
    %276 = vmatprep.subr.mxu0 0.0
    %277 = vmatpush1.msra.mxu0 %v260
    %278 = vmatprep.subr.mxu0 0.0
    %279 = vmatpush1.msra.mxu0 %v259
    %280 = vmatprep.subr.mxu0 0.0
    %281 = vmatpush1.msra.mxu0 %v258
    %282 = vmatprep.subr.mxu0 0.0
    %283 = vmatpush1.msra.mxu0 %v257
    %284 = vmatprep.subr.mxu0 0.0
    %285 = vmatpush1.msra.mxu0 %v256
    %286 = vmatprep.subr.mxu0 0.0
    %287 = vmatpush1.msra.mxu0 %v255
    %288 = vmatprep.subr.mxu0 0.0
    %289 = vmatpush1.msra.mxu0 %v254
    %290 = vmatprep.subr.mxu0 0.0
    %291 = vmatpush1.msra.mxu0 %v253
    %292 = vmatprep.subr.mxu0 0.0
    %293 = vmatpush1.msra.mxu0 %v252
    %294 = vmatprep.subr.mxu0 0.0
    %295 = vmatpush1.msra.mxu0 %v251
    %296 = vmatprep.subr.mxu0 0.0
    %297 = vmatpush1.msra.mxu0 %v250
    %298 = vmatprep.subr.mxu0 0.0
    %299 = vmatpush2.msra.mxu0 0.0
    %300 = vmatprep.subr.mxu0 0.0
    %301 = vmatpush2.msra.mxu0 0.0
    %302 = vmatprep.subr.mxu0 0.0
    %303 = vmatpush2.msra.mxu0 0.0
    %304 = vmatprep.subr.mxu0 0.0
    %305 = vmatpush2.msra.mxu0 0.0
    %306 = vmatprep.subr.mxu0 0.0
    %307 = vmatpush2.msra.mxu0 0.0
    %308 = vmatprep.subr.mxu0 0.0
    %309 = vmatpush2.msra.mxu0 0.0
    %310 = vmatprep.subr.mxu0 0.0
    %311 = vmatpush2.msra.mxu0 0.0
    %312 = vmatprep.subr.mxu0 0.0
    %313 = vmatpush2.msra.mxu0 0.0
    %314 = vmatprep.subr.mxu0 0.0
    %315 = vmatpush2.msra.mxu0 0.0
    %316 = vmatprep.subr.mxu0 0.0
    %317 = vmatpush2.msra.mxu0 0.0
    %318 = vmatprep.subr.mxu0 0.0
    %319 = vmatpush2.msra.mxu0 0.0
    %320 = vmatprep.subr.mxu0 0.0
    %321 = vmatpush2.msra.mxu0 0.0
    %322 = vmatprep.subr.mxu0 0.0
    %323 = vmatpush2.msra.mxu0 0.0
    %324 = vmatprep.subr.mxu0 0.0
    %325 = vmatpush2.msra.mxu0 0.0
    %326 = vmatprep.subr.mxu0 0.0
    %327 = vmatpush2.msra.mxu0 0.0
    %328 = vmatprep.subr.mxu0 0.0
    %329 = vmatpush2.msra.mxu0 0.0
    %330 = vmatprep.mubr.f32.mxu0 0.0
    %331 = vmatmul.mubr.f32.gmra.mxu0 %v249
    %v332 = vpop.f32.mrf.mxu0
    %v333 = vadd.f32 0.0, %v332
    %v334 = vpop.f32.mrf.mxu0
    %335 = vdwg.mxu0
    %v336 = vadd.f32 %v53, %v333
    %v337 = vxor.u32 %v336, 2147483648
    %v338 = vmul.f32 %v337, 1.442695
    %v339 = vpow.pop %v338
    %v340 = vadd.f32 %v339, 1.0
    %v341 = vrcp.pop %v340
    %v342 = vmul.f32 1.0, %v341
    %v343 = vtanh.pop %v336
    %344 = vrot.lane.b32.xlu0 %v342, 96
    %v345 = vpop.permute.xlu0 %344
    %346 = vrot.lane.b32.xlu0 %v343, 64
    %v347 = vpop.permute.xlu0 %346
    %348 = vrot.lane.b32.xlu0 %v342, 32
    %v349 = vpop.permute.xlu0 %348
    %v350 = vmul.f32 %v345, 0.0
    %v351 = vmul.f32 %v342, %v347
    %v352 = vadd.f32 %v350, %v351
    %v353 = vtanh.pop %v352
    %v354 = vmul.f32 %v349, %v353
    %v355 = vld [vmem:[#allocation6 + $0x140] sm:$0xff]
    %v356 = vld [vmem:[#allocation6 + $0x148] sm:$0xff]
    %v357 = vld [vmem:[#allocation6 + $0x150] sm:$0xff]
    %v358 = vld [vmem:[#allocation6 + $0x158] sm:$0xff]
    %v359 = vld [vmem:[#allocation6 + $0x160] sm:$0xff]
    %v360 = vld [vmem:[#allocation6 + $0x168] sm:$0xff]
    %v361 = vld [vmem:[#allocation6 + $0x170] sm:$0xff]
    %v362 = vld [vmem:[#allocation6 + $0x178] sm:$0xff]
    %v363 = vld [vmem:[#allocation6 + $0x180] sm:$0xff]
    %v364 = vld [vmem:[#allocation6 + $0x188] sm:$0xff]
    %v365 = vld [vmem:[#allocation6 + $0x190] sm:$0xff]
    %v366 = vld [vmem:[#allocation6 + $0x198] sm:$0xff]
    %v367 = vld [vmem:[#allocation6 + $0x1a0] sm:$0xff]
    %v368 = vld [vmem:[#allocation6 + $0x1a8] sm:$0xff]
    %v369 = vld [vmem:[#allocation6 + $0x1b0] sm:$0xff]
    %v370 = vld [vmem:[#allocation6 + $0x1b8] sm:$0xff]
    %371 = vmatprep.subr.mxu0 0.0
    %372 = vmatpush1.msra.mxu0 %v370
    %373 = vmatprep.subr.mxu0 0.0
    %374 = vmatpush1.msra.mxu0 %v369
    %375 = vmatprep.subr.mxu0 0.0
    %376 = vmatpush1.msra.mxu0 %v368
    %377 = vmatprep.subr.mxu0 0.0
    %378 = vmatpush1.msra.mxu0 %v367
    %379 = vmatprep.subr.mxu0 0.0
    %380 = vmatpush1.msra.mxu0 %v366
    %381 = vmatprep.subr.mxu0 0.0
    %382 = vmatpush1.msra.mxu0 %v365
    %383 = vmatprep.subr.mxu0 0.0
    %384 = vmatpush1.msra.mxu0 %v364
    %385 = vmatprep.subr.mxu0 0.0
    %386 = vmatpush1.msra.mxu0 %v363
    %387 = vmatprep.subr.mxu0 0.0
    %388 = vmatpush1.msra.mxu0 %v362
    %389 = vmatprep.subr.mxu0 0.0
    %390 = vmatpush1.msra.mxu0 %v361
    %391 = vmatprep.subr.mxu0 0.0
    %392 = vmatpush1.msra.mxu0 %v360
    %393 = vmatprep.subr.mxu0 0.0
    %394 = vmatpush1.msra.mxu0 %v359
    %395 = vmatprep.subr.mxu0 0.0
    %396 = vmatpush1.msra.mxu0 %v358
    %397 = vmatprep.subr.mxu0 0.0
    %398 = vmatpush1.msra.mxu0 %v357
    %399 = vmatprep.subr.mxu0 0.0
    %400 = vmatpush1.msra.mxu0 %v356
    %401 = vmatprep.subr.mxu0 0.0
    %402 = vmatpush1.msra.mxu0 %v355
    %403 = vmatprep.subr.mxu0 0.0
    %404 = vmatpush2.msra.mxu0 0.0
    %405 = vmatprep.subr.mxu0 0.0
    %406 = vmatpush2.msra.mxu0 0.0
    %407 = vmatprep.subr.mxu0 0.0
    %408 = vmatpush2.msra.mxu0 0.0
    %409 = vmatprep.subr.mxu0 0.0
    %410 = vmatpush2.msra.mxu0 0.0
    %411 = vmatprep.subr.mxu0 0.0
    %412 = vmatpush2.msra.mxu0 0.0
    %413 = vmatprep.subr.mxu0 0.0
    %414 = vmatpush2.msra.mxu0 0.0
    %415 = vmatprep.subr.mxu0 0.0
    %416 = vmatpush2.msra.mxu0 0.0
    %417 = vmatprep.subr.mxu0 0.0
    %418 = vmatpush2.msra.mxu0 0.0
    %419 = vmatprep.subr.mxu0 0.0
    %420 = vmatpush2.msra.mxu0 0.0
    %421 = vmatprep.subr.mxu0 0.0
    %422 = vmatpush2.msra.mxu0 0.0
    %423 = vmatprep.subr.mxu0 0.0
    %424 = vmatpush2.msra.mxu0 0.0
    %425 = vmatprep.subr.mxu0 0.0
    %426 = vmatpush2.msra.mxu0 0.0
    %427 = vmatprep.subr.mxu0 0.0
    %428 = vmatpush2.msra.mxu0 0.0
    %429 = vmatprep.subr.mxu0 0.0
    %430 = vmatpush2.msra.mxu0 0.0
    %431 = vmatprep.subr.mxu0 0.0
    %432 = vmatpush2.msra.mxu0 0.0
    %433 = vmatprep.subr.mxu0 0.0
    %434 = vmatpush2.msra.mxu0 0.0
    %435 = vmatprep.mubr.f32.mxu0 0.0
    %436 = vmatmul.mubr.f32.gmra.mxu0 %v354
    %v437 = vpop.f32.mrf.mxu0
    %v438 = vadd.f32 0.0, %v437
    %v439 = vpop.f32.mrf.mxu0
    %440 = vdwg.mxu0
    %v441 = vadd.f32 %v53, %v438
    %v442 = vld [vmem:[#allocation2 + $0x1] sm:$0x1]
    %443 = vmatprep.subr.mxu0 0.0
    %444 = vmatpush1.msra.mxu0 %v160
    %445 = vmatprep.subr.mxu0 0.0
    %446 = vmatpush1.msra.mxu0 %v159
    %447 = vmatprep.subr.mxu0 0.0
    %448 = vmatpush1.msra.mxu0 %v158
    %449 = vmatprep.subr.mxu0 0.0
    %450 = vmatpush1.msra.mxu0 %v157
    %451 = vmatprep.subr.mxu0 0.0
    %452 = vmatpush1.msra.mxu0 %v156
    %453 = vmatprep.subr.mxu0 0.0
    %454 = vmatpush1.msra.mxu0 %v155
    %455 = vmatprep.subr.mxu0 0.0
    %456 = vmatpush1.msra.mxu0 %v154
    %457 = vmatprep.subr.mxu0 0.0
    %458 = vmatpush1.msra.mxu0 %v153
    %459 = vmatprep.subr.mxu0 0.0
    %460 = vmatpush1.msra.mxu0 %v152
    %461 = vmatprep.subr.mxu0 0.0
    %462 = vmatpush1.msra.mxu0 %v151
    %463 = vmatprep.subr.mxu0 0.0
    %464 = vmatpush1.msra.mxu0 %v150
    %465 = vmatprep.subr.mxu0 0.0
    %466 = vmatpush1.msra.mxu0 %v149
    %467 = vmatprep.subr.mxu0 0.0
    %468 = vmatpush1.msra.mxu0 %v148
    %469 = vmatprep.subr.mxu0 0.0
    %470 = vmatpush1.msra.mxu0 %v147
    %471 = vmatprep.subr.mxu0 0.0
    %472 = vmatpush1.msra.mxu0 %v146
    %473 = vmatprep.subr.mxu0 0.0
    %474 = vmatpush1.msra.mxu0 %v145
    %475 = vmatprep.subr.mxu0 0.0
    %476 = vmatpush2.msra.mxu0 0.0
    %477 = vmatprep.subr.mxu0 0.0
    %478 = vmatpush2.msra.mxu0 0.0
    %479 = vmatprep.subr.mxu0 0.0
    %480 = vmatpush2.msra.mxu0 0.0
    %481 = vmatprep.subr.mxu0 0.0
    %482 = vmatpush2.msra.mxu0 0.0
    %483 = vmatprep.subr.mxu0 0.0
    %484 = vmatpush2.msra.mxu0 0.0
    %485 = vmatprep.subr.mxu0 0.0
    %486 = vmatpush2.msra.mxu0 0.0
    %487 = vmatprep.subr.mxu0 0.0
    %488 = vmatpush2.msra.mxu0 0.0
    %489 = vmatprep.subr.mxu0 0.0
    %490 = vmatpush2.msra.mxu0 0.0
    %491 = vmatprep.subr.mxu0 0.0
    %492 = vmatpush2.msra.mxu0 0.0
    %493 = vmatprep.subr.mxu0 0.0
    %494 = vmatpush2.msra.mxu0 0.0
    %495 = vmatprep.subr.mxu0 0.0
    %496 = vmatpush2.msra.mxu0 0.0
    %497 = vmatprep.subr.mxu0 0.0
    %498 = vmatpush2.msra.mxu0 0.0
    %499 = vmatprep.subr.mxu0 0.0
    %500 = vmatpush2.msra.mxu0 0.0
    %501 = vmatprep.subr.mxu0 0.0
    %502 = vmatpush2.msra.mxu0 0.0
    %503 = vmatprep.subr.mxu0 0.0
    %504 = vmatpush2.msra.mxu0 0.0
    %505 = vmatprep.subr.mxu0 0.0
    %506 = vmatpush2.msra.mxu0 0.0
    %507 = vmatprep.mubr.f32.mxu0 0.0
    %508 = vmatmul.mubr.f32.gmra.mxu0 %v249
    %v509 = vpop.f32.mrf.mxu0
    %v510 = vadd.f32 0.0, %v509
    %v511 = vpop.f32.mrf.mxu0
    %512 = vdwg.mxu0
    %v513 = vadd.f32 %v442, %v510
    %v514 = vxor.u32 %v513, 2147483648
    %v515 = vmul.f32 %v514, 1.442695
    %v516 = vpow.pop %v515
    %v517 = vadd.f32 %v516, 1.0
    %v518 = vrcp.pop %v517
    %v519 = vmul.f32 1.0, %v518
    %v520 = vtanh.pop %v513
    %521 = vrot.lane.b32.xlu0 %v519, 96
    %v522 = vpop.permute.xlu0 %521
    %523 = vrot.lane.b32.xlu0 %v520, 64
    %v524 = vpop.permute.xlu0 %523
    %525 = vrot.lane.b32.xlu0 %v519, 32
    %v526 = vpop.permute.xlu0 %525
    %v527 = vmul.f32 %v522, %v247
    %v528 = vmul.f32 %v519, %v524
    %v529 = vadd.f32 %v527, %v528
    %v530 = vtanh.pop %v529
    %v531 = vmul.f32 %v526, %v530
    %532 = vmatprep.subr.mxu0 0.0
    %533 = vmatpush1.msra.mxu0 %v265
    %534 = vmatprep.subr.mxu0 0.0
    %535 = vmatpush1.msra.mxu0 %v264
    %536 = vmatprep.subr.mxu0 0.0
    %537 = vmatpush1.msra.mxu0 %v263
    %538 = vmatprep.subr.mxu0 0.0
    %539 = vmatpush1.msra.mxu0 %v262
    %540 = vmatprep.subr.mxu0 0.0
    %541 = vmatpush1.msra.mxu0 %v261
    %542 = vmatprep.subr.mxu0 0.0
    %543 = vmatpush1.msra.mxu0 %v260
    %544 = vmatprep.subr.mxu0 0.0
    %545 = vmatpush1.msra.mxu0 %v259
    %546 = vmatprep.subr.mxu0 0.0
    %547 = vmatpush1.msra.mxu0 %v258
    %548 = vmatprep.subr.mxu0 0.0
    %549 = vmatpush1.msra.mxu0 %v257
    %550 = vmatprep.subr.mxu0 0.0
    %551 = vmatpush1.msra.mxu0 %v256
    %552 = vmatprep.subr.mxu0 0.0
    %553 = vmatpush1.msra.mxu0 %v255
    %554 = vmatprep.subr.mxu0 0.0
    %555 = vmatpush1.msra.mxu0 %v254
    %556 = vmatprep.subr.mxu0 0.0
    %557 = vmatpush1.msra.mxu0 %v253
    %558 = vmatprep.subr.mxu0 0.0
    %559 = vmatpush1.msra.mxu0 %v252
    %560 = vmatprep.subr.mxu0 0.0
    %561 = vmatpush1.msra.mxu0 %v251
    %562 = vmatprep.subr.mxu0 0.0
    %563 = vmatpush1.msra.mxu0 %v250
    %564 = vmatprep.subr.mxu0 0.0
    %565 = vmatpush2.msra.mxu0 0.0
    %566 = vmatprep.subr.mxu0 0.0
    %567 = vmatpush2.msra.mxu0 0.0
    %568 = vmatprep.subr.mxu0 0.0
    %569 = vmatpush2.msra.mxu0 0.0
    %570 = vmatprep.subr.mxu0 0.0
    %571 = vmatpush2.msra.mxu0 0.0
    %572 = vmatprep.subr.mxu0 0.0
    %573 = vmatpush2.msra.mxu0 0.0
    %574 = vmatprep.subr.mxu0 0.0
    %575 = vmatpush2.msra.mxu0 0.0
    %576 = vmatprep.subr.mxu0 0.0
    %577 = vmatpush2.msra.mxu0 0.0
    %578 = vmatprep.subr.mxu0 0.0
    %579 = vmatpush2.msra.mxu0 0.0
    %580 = vmatprep.subr.mxu0 0.0
    %581 = vmatpush2.msra.mxu0 0.0
    %582 = vmatprep.subr.mxu0 0.0
    %583 = vmatpush2.msra.mxu0 0.0
    %584 = vmatprep.subr.mxu0 0.0
    %585 = vmatpush2.msra.mxu0 0.0
    %586 = vmatprep.subr.mxu0 0.0
    %587 = vmatpush2.msra.mxu0 0.0
    %588 = vmatprep.subr.mxu0 0.0
    %589 = vmatpush2.msra.mxu0 0.0
    %590 = vmatprep.subr.mxu0 0.0
    %591 = vmatpush2.msra.mxu0 0.0
    %592 = vmatprep.subr.mxu0 0.0
    %593 = vmatpush2.msra.mxu0 0.0
    %594 = vmatprep.subr.mxu0 0.0
    %595 = vmatpush2.msra.mxu0 0.0
    %596 = vmatprep.mubr.f32.mxu0 0.0
    %597 = vmatmul.mubr.f32.gmra.mxu0 %v531
    %v598 = vpop.f32.mrf.mxu0
    %v599 = vadd.f32 0.0, %v598
    %v600 = vpop.f32.mrf.mxu0
    %601 = vdwg.mxu0
    %v602 = vadd.f32 %v441, %v599
    %v603 = vxor.u32 %v602, 2147483648
    %v604 = vmul.f32 %v603, 1.442695
    %v605 = vpow.pop %v604
    %v606 = vadd.f32 %v605, 1.0
    %v607 = vrcp.pop %v606
    %v608 = vmul.f32 1.0, %v607
    %v609 = vtanh.pop %v602
    %610 = vrot.lane.b32.xlu0 %v608, 96
    %v611 = vpop.permute.xlu0 %610
    %612 = vrot.lane.b32.xlu0 %v609, 64
    %v613 = vpop.permute.xlu0 %612
    %614 = vrot.lane.b32.xlu0 %v608, 32
    %v615 = vpop.permute.xlu0 %614
    %v616 = vmul.f32 %v611, %v352
    %v617 = vmul.f32 %v608, %v613
    %v618 = vadd.f32 %v616, %v617
    %v619 = vtanh.pop %v618
    %v620 = vmul.f32 %v615, %v619
    %621 = vmatprep.subr.mxu0 0.0
    %622 = vmatpush1.msra.mxu0 %v370
    %623 = vmatprep.subr.mxu0 0.0
    %624 = vmatpush1.msra.mxu0 %v369
    %625 = vmatprep.subr.mxu0 0.0
    %626 = vmatpush1.msra.mxu0 %v368
    %627 = vmatprep.subr.mxu0 0.0
    %628 = vmatpush1.msra.mxu0 %v367
    %629 = vmatprep.subr.mxu0 0.0
    %630 = vmatpush1.msra.mxu0 %v366
    %631 = vmatprep.subr.mxu0 0.0
    %632 = vmatpush1.msra.mxu0 %v365
    %633 = vmatprep.subr.mxu0 0.0
    %634 = vmatpush1.msra.mxu0 %v364
    %635 = vmatprep.subr.mxu0 0.0
    %636 = vmatpush1.msra.mxu0 %v363
    %637 = vmatprep.subr.mxu0 0.0
    %638 = vmatpush1.msra.mxu0 %v362
    %639 = vmatprep.subr.mxu0 0.0
    %640 = vmatpush1.msra.mxu0 %v361
    %641 = vmatprep.subr.mxu0 0.0
    %642 = vmatpush1.msra.mxu0 %v360
    %643 = vmatprep.subr.mxu0 0.0
    %644 = vmatpush1.msra.mxu0 %v359
    %645 = vmatprep.subr.mxu0 0.0
    %646 = vmatpush1.msra.mxu0 %v358
    %647 = vmatprep.subr.mxu0 0.0
    %648 = vmatpush1.msra.mxu0 %v357
    %649 = vmatprep.subr.mxu0 0.0
    %650 = vmatpush1.msra.mxu0 %v356
    %651 = vmatprep.subr.mxu0 0.0
    %652 = vmatpush1.msra.mxu0 %v355
    %653 = vmatprep.subr.mxu0 0.0
    %654 = vmatpush2.msra.mxu0 0.0
    %655 = vmatprep.subr.mxu0 0.0
    %656 = vmatpush2.msra.mxu0 0.0
    %657 = vmatprep.subr.mxu0 0.0
    %658 = vmatpush2.msra.mxu0 0.0
    %659 = vmatprep.subr.mxu0 0.0
    %660 = vmatpush2.msra.mxu0 0.0
    %661 = vmatprep.subr.mxu0 0.0
    %662 = vmatpush2.msra.mxu0 0.0
    %663 = vmatprep.subr.mxu0 0.0
    %664 = vmatpush2.msra.mxu0 0.0
    %665 = vmatprep.subr.mxu0 0.0
    %666 = vmatpush2.msra.mxu0 0.0
    %667 = vmatprep.subr.mxu0 0.0
    %668 = vmatpush2.msra.mxu0 0.0
    %669 = vmatprep.subr.mxu0 0.0
    %670 = vmatpush2.msra.mxu0 0.0
    %671 = vmatprep.subr.mxu0 0.0
    %672 = vmatpush2.msra.mxu0 0.0
    %673 = vmatprep.subr.mxu0 0.0
    %674 = vmatpush2.msra.mxu0 0.0
    %675 = vmatprep.subr.mxu0 0.0
    %676 = vmatpush2.msra.mxu0 0.0
    %677 = vmatprep.subr.mxu0 0.0
    %678 = vmatpush2.msra.mxu0 0.0
    %679 = vmatprep.subr.mxu0 0.0
    %680 = vmatpush2.msra.mxu0 0.0
    %681 = vmatprep.subr.mxu0 0.0
    %682 = vmatpush2.msra.mxu0 0.0
    %683 = vmatprep.subr.mxu0 0.0
    %684 = vmatpush2.msra.mxu0 0.0
    %685 = vmatprep.mubr.f32.mxu0 0.0
    %686 = vmatmul.mubr.f32.gmra.mxu0 %v620
    %v687 = vpop.f32.mrf.mxu0
    %v688 = vadd.f32 0.0, %v687
    %v689 = vpop.f32.mrf.mxu0
    %690 = vdwg.mxu0
    %v691 = vadd.f32 %v53, %v688
    %v692 = vld [vmem:[#allocation2 + $0x2] sm:$0x1]
    %693 = vmatprep.subr.mxu0 0.0
    %694 = vmatpush1.msra.mxu0 %v160
    %695 = vmatprep.subr.mxu0 0.0
    %696 = vmatpush1.msra.mxu0 %v159
    %697 = vmatprep.subr.mxu0 0.0
    %698 = vmatpush1.msra.mxu0 %v158
    %699 = vmatprep.subr.mxu0 0.0
    %700 = vmatpush1.msra.mxu0 %v157
    %701 = vmatprep.subr.mxu0 0.0
    %702 = vmatpush1.msra.mxu0 %v156
    %703 = vmatprep.subr.mxu0 0.0
    %704 = vmatpush1.msra.mxu0 %v155
    %705 = vmatprep.subr.mxu0 0.0
    %706 = vmatpush1.msra.mxu0 %v154
    %707 = vmatprep.subr.mxu0 0.0
    %708 = vmatpush1.msra.mxu0 %v153
    %709 = vmatprep.subr.mxu0 0.0
    %710 = vmatpush1.msra.mxu0 %v152
    %711 = vmatprep.subr.mxu0 0.0
    %712 = vmatpush1.msra.mxu0 %v151
    %713 = vmatprep.subr.mxu0 0.0
    %714 = vmatpush1.msra.mxu0 %v150
    %715 = vmatprep.subr.mxu0 0.0
    %716 = vmatpush1.msra.mxu0 %v149
    %717 = vmatprep.subr.mxu0 0.0
    %718 = vmatpush1.msra.mxu0 %v148
    %719 = vmatprep.subr.mxu0 0.0
    %720 = vmatpush1.msra.mxu0 %v147
    %721 = vmatprep.subr.mxu0 0.0
    %722 = vmatpush1.msra.mxu0 %v146
    %723 = vmatprep.subr.mxu0 0.0
    %724 = vmatpush1.msra.mxu0 %v145
    %725 = vmatprep.subr.mxu0 0.0
    %726 = vmatpush2.msra.mxu0 0.0
    %727 = vmatprep.subr.mxu0 0.0
    %728 = vmatpush2.msra.mxu0 0.0
    %729 = vmatprep.subr.mxu0 0.0
    %730 = vmatpush2.msra.mxu0 0.0
    %731 = vmatprep.subr.mxu0 0.0
    %732 = vmatpush2.msra.mxu0 0.0
    %733 = vmatprep.subr.mxu0 0.0
    %734 = vmatpush2.msra.mxu0 0.0
    %735 = vmatprep.subr.mxu0 0.0
    %736 = vmatpush2.msra.mxu0 0.0
    %737 = vmatprep.subr.mxu0 0.0
    %738 = vmatpush2.msra.mxu0 0.0
    %739 = vmatprep.subr.mxu0 0.0
    %740 = vmatpush2.msra.mxu0 0.0
    %741 = vmatprep.subr.mxu0 0.0
    %742 = vmatpush2.msra.mxu0 0.0
    %743 = vmatprep.subr.mxu0 0.0
    %744 = vmatpush2.msra.mxu0 0.0
    %745 = vmatprep.subr.mxu0 0.0
    %746 = vmatpush2.msra.mxu0 0.0
    %747 = vmatprep.subr.mxu0 0.0
    %748 = vmatpush2.msra.mxu0 0.0
    %749 = vmatprep.subr.mxu0 0.0
    %750 = vmatpush2.msra.mxu0 0.0
    %751 = vmatprep.subr.mxu0 0.0
    %752 = vmatpush2.msra.mxu0 0.0
    %753 = vmatprep.subr.mxu0 0.0
    %754 = vmatpush2.msra.mxu0 0.0
    %755 = vmatprep.subr.mxu0 0.0
    %756 = vmatpush2.msra.mxu0 0.0
    %757 = vmatprep.mubr.f32.mxu0 0.0
    %758 = vmatmul.mubr.f32.gmra.mxu0 %v531
    %v759 = vpop.f32.mrf.mxu0
    %v760 = vadd.f32 0.0, %v759
    %v761 = vpop.f32.mrf.mxu0
    %762 = vdwg.mxu0
    %v763 = vadd.f32 %v692, %v760
    %v764 = vxor.u32 %v763, 2147483648
    %v765 = vmul.f32 %v764, 1.442695
    %v766 = vpow.pop %v765
    %v767 = vadd.f32 %v766, 1.0
    %v768 = vrcp.pop %v767
    %v769 = vmul.f32 1.0, %v768
    %v770 = vtanh.pop %v763
    %771 = vrot.lane.b32.xlu0 %v769, 96
    %v772 = vpop.permute.xlu0 %771
    %773 = vrot.lane.b32.xlu0 %v770, 64
    %v774 = vpop.permute.xlu0 %773
    %775 = vrot.lane.b32.xlu0 %v769, 32
    %v776 = vpop.permute.xlu0 %775
    %v777 = vmul.f32 %v772, %v529
    %v778 = vmul.f32 %v769, %v774
    %v779 = vadd.f32 %v777, %v778
    %v780 = vtanh.pop %v779
    %v781 = vmul.f32 %v776, %v780
    %782 = vmatprep.subr.mxu0 0.0
    %783 = vmatpush1.msra.mxu0 %v265
    %784 = vmatprep.subr.mxu0 0.0
    %785 = vmatpush1.msra.mxu0 %v264
    %786 = vmatprep.subr.mxu0 0.0
    %787 = vmatpush1.msra.mxu0 %v263
    %788 = vmatprep.subr.mxu0 0.0
    %789 = vmatpush1.msra.mxu0 %v262
    %790 = vmatprep.subr.mxu0 0.0
    %791 = vmatpush1.msra.mxu0 %v261
    %792 = vmatprep.subr.mxu0 0.0
    %793 = vmatpush1.msra.mxu0 %v260
    %794 = vmatprep.subr.mxu0 0.0
    %795 = vmatpush1.msra.mxu0 %v259
    %796 = vmatprep.subr.mxu0 0.0
    %797 = vmatpush1.msra.mxu0 %v258
    %798 = vmatprep.subr.mxu0 0.0
    %799 = vmatpush1.msra.mxu0 %v257
    %800 = vmatprep.subr.mxu0 0.0
    %801 = vmatpush1.msra.mxu0 %v256
    %802 = vmatprep.subr.mxu0 0.0
    %803 = vmatpush1.msra.mxu0 %v255
    %804 = vmatprep.subr.mxu0 0.0
    %805 = vmatpush1.msra.mxu0 %v254
    %806 = vmatprep.subr.mxu0 0.0
    %807 = vmatpush1.msra.mxu0 %v253
    %808 = vmatprep.subr.mxu0 0.0
    %809 = vmatpush1.msra.mxu0 %v252
    %810 = vmatprep.subr.mxu0 0.0
    %811 = vmatpush1.msra.mxu0 %v251
    %812 = vmatprep.subr.mxu0 0.0
    %813 = vmatpush1.msra.mxu0 %v250
    %814 = vmatprep.subr.mxu0 0.0
    %815 = vmatpush2.msra.mxu0 0.0
    %816 = vmatprep.subr.mxu0 0.0
    %817 = vmatpush2.msra.mxu0 0.0
    %818 = vmatprep.subr.mxu0 0.0
    %819 = vmatpush2.msra.mxu0 0.0
    %820 = vmatprep.subr.mxu0 0.0
    %821 = vmatpush2.msra.mxu0 0.0
    %822 = vmatprep.subr.mxu0 0.0
    %823 = vmatpush2.msra.mxu0 0.0
    %824 = vmatprep.subr.mxu0 0.0
    %825 = vmatpush2.msra.mxu0 0.0
    %826 = vmatprep.subr.mxu0 0.0
    %827 = vmatpush2.msra.mxu0 0.0
    %828 = vmatprep.subr.mxu0 0.0
    %829 = vmatpush2.msra.mxu0 0.0
    %830 = vmatprep.subr.mxu0 0.0
    %831 = vmatpush2.msra.mxu0 0.0
    %832 = vmatprep.subr.mxu0 0.0
    %833 = vmatpush2.msra.mxu0 0.0
    %834 = vmatprep.subr.mxu0 0.0
    %835 = vmatpush2.msra.mxu0 0.0
    %836 = vmatprep.subr.mxu0 0.0
    %837 = vmatpush2.msra.mxu0 0.0
    %838 = vmatprep.subr.mxu0 0.0
    %839 = vmatpush2.msra.mxu0 0.0
    %840 = vmatprep.subr.mxu0 0.0
    %841 = vmatpush2.msra.mxu0 0.0
    %842 = vmatprep.subr.mxu0 0.0
    %843 = vmatpush2.msra.mxu0 0.0
    %844 = vmatprep.subr.mxu0 0.0
    %845 = vmatpush2.msra.mxu0 0.0
    %846 = vmatprep.mubr.f32.mxu0 0.0
    %847 = vmatmul.mubr.f32.gmra.mxu0 %v781
    %v848 = vpop.f32.mrf.mxu0
    %v849 = vadd.f32 0.0, %v848
    %v850 = vpop.f32.mrf.mxu0
    %851 = vdwg.mxu0
    %v852 = vadd.f32 %v691, %v849
    %v853 = vxor.u32 %v852, 2147483648
    %v854 = vmul.f32 %v853, 1.442695
    %v855 = vpow.pop %v854
    %v856 = vadd.f32 %v855, 1.0
    %v857 = vrcp.pop %v856
    %v858 = vmul.f32 1.0, %v857
    %v859 = vtanh.pop %v852
    %860 = vrot.lane.b32.xlu0 %v858, 96
    %v861 = vpop.permute.xlu0 %860
    %862 = vrot.lane.b32.xlu0 %v859, 64
    %v863 = vpop.permute.xlu0 %862
    %864 = vrot.lane.b32.xlu0 %v858, 32
    %v865 = vpop.permute.xlu0 %864
    %v866 = vmul.f32 %v861, %v618
    %v867 = vmul.f32 %v858, %v863
    %v868 = vadd.f32 %v866, %v867
    %v869 = vtanh.pop %v868
    %v870 = vmul.f32 %v865, %v869
    %871 = vmatprep.subr.mxu0 0.0
    %872 = vmatpush1.msra.mxu0 %v370
    %873 = vmatprep.subr.mxu0 0.0
    %874 = vmatpush1.msra.mxu0 %v369
    %875 = vmatprep.subr.mxu0 0.0
    %876 = vmatpush1.msra.mxu0 %v368
    %877 = vmatprep.subr.mxu0 0.0
    %878 = vmatpush1.msra.mxu0 %v367
    %879 = vmatprep.subr.mxu0 0.0
    %880 = vmatpush1.msra.mxu0 %v366
    %881 = vmatprep.subr.mxu0 0.0
    %882 = vmatpush1.msra.mxu0 %v365
    %883 = vmatprep.subr.mxu0 0.0
    %884 = vmatpush1.msra.mxu0 %v364
    %885 = vmatprep.subr.mxu0 0.0
    %886 = vmatpush1.msra.mxu0 %v363
    %887 = vmatprep.subr.mxu0 0.0
    %888 = vmatpush1.msra.mxu0 %v362
    %889 = vmatprep.subr.mxu0 0.0
    %890 = vmatpush1.msra.mxu0 %v361
    %891 = vmatprep.subr.mxu0 0.0
    %892 = vmatpush1.msra.mxu0 %v360
    %893 = vmatprep.subr.mxu0 0.0
    %894 = vmatpush1.msra.mxu0 %v359
    %895 = vmatprep.subr.mxu0 0.0
    %896 = vmatpush1.msra.mxu0 %v358
    %897 = vmatprep.subr.mxu0 0.0
    %898 = vmatpush1.msra.mxu0 %v357
    %899 = vmatprep.subr.mxu0 0.0
    %900 = vmatpush1.msra.mxu0 %v356
    %901 = vmatprep.subr.mxu0 0.0
    %902 = vmatpush1.msra.mxu0 %v355
    %903 = vmatprep.subr.mxu0 0.0
    %904 = vmatpush2.msra.mxu0 0.0
    %905 = vmatprep.subr.mxu0 0.0
    %906 = vmatpush2.msra.mxu0 0.0
    %907 = vmatprep.subr.mxu0 0.0
    %908 = vmatpush2.msra.mxu0 0.0
    %909 = vmatprep.subr.mxu0 0.0
    %910 = vmatpush2.msra.mxu0 0.0
    %911 = vmatprep.subr.mxu0 0.0
    %912 = vmatpush2.msra.mxu0 0.0
    %913 = vmatprep.subr.mxu0 0.0
    %914 = vmatpush2.msra.mxu0 0.0
    %915 = vmatprep.subr.mxu0 0.0
    %916 = vmatpush2.msra.mxu0 0.0
    %917 = vmatprep.subr.mxu0 0.0
    %918 = vmatpush2.msra.mxu0 0.0
    %919 = vmatprep.subr.mxu0 0.0
    %920 = vmatpush2.msra.mxu0 0.0
    %921 = vmatprep.subr.mxu0 0.0
    %922 = vmatpush2.msra.mxu0 0.0
    %923 = vmatprep.subr.mxu0 0.0
    %924 = vmatpush2.msra.mxu0 0.0
    %925 = vmatprep.subr.mxu0 0.0
    %926 = vmatpush2.msra.mxu0 0.0
    %927 = vmatprep.subr.mxu0 0.0
    %928 = vmatpush2.msra.mxu0 0.0
    %929 = vmatprep.subr.mxu0 0.0
    %930 = vmatpush2.msra.mxu0 0.0
    %931 = vmatprep.subr.mxu0 0.0
    %932 = vmatpush2.msra.mxu0 0.0
    %933 = vmatprep.subr.mxu0 0.0
    %934 = vmatpush2.msra.mxu0 0.0
    %935 = vmatprep.mubr.f32.mxu0 0.0
    %936 = vmatmul.mubr.f32.gmra.mxu0 %v870
    %v937 = vpop.f32.mrf.mxu0
    %v938 = vadd.f32 0.0, %v937
    %v939 = vpop.f32.mrf.mxu0
    %940 = vdwg.mxu0
    %v941 = vadd.f32 %v53, %v938
    %v942 = vld [vmem:[#allocation2 + $0x3] sm:$0x1]
    %943 = vmatprep.subr.mxu0 0.0
    %944 = vmatpush1.msra.mxu0 %v160
    %945 = vmatprep.subr.mxu0 0.0
    %946 = vmatpush1.msra.mxu0 %v159
    %947 = vmatprep.subr.mxu0 0.0
    %948 = vmatpush1.msra.mxu0 %v158
    %949 = vmatprep.subr.mxu0 0.0
    %950 = vmatpush1.msra.mxu0 %v157
    %951 = vmatprep.subr.mxu0 0.0
    %952 = vmatpush1.msra.mxu0 %v156
    %953 = vmatprep.subr.mxu0 0.0
    %954 = vmatpush1.msra.mxu0 %v155
    %955 = vmatprep.subr.mxu0 0.0
    %956 = vmatpush1.msra.mxu0 %v154
    %957 = vmatprep.subr.mxu0 0.0
    %958 = vmatpush1.msra.mxu0 %v153
    %959 = vmatprep.subr.mxu0 0.0
    %960 = vmatpush1.msra.mxu0 %v152
    %961 = vmatprep.subr.mxu0 0.0
    %962 = vmatpush1.msra.mxu0 %v151
    %963 = vmatprep.subr.mxu0 0.0
    %964 = vmatpush1.msra.mxu0 %v150
    %965 = vmatprep.subr.mxu0 0.0
    %966 = vmatpush1.msra.mxu0 %v149
    %967 = vmatprep.subr.mxu0 0.0
    %968 = vmatpush1.msra.mxu0 %v148
    %969 = vmatprep.subr.mxu0 0.0
    %970 = vmatpush1.msra.mxu0 %v147
    %971 = vmatprep.subr.mxu0 0.0
    %972 = vmatpush1.msra.mxu0 %v146
    %973 = vmatprep.subr.mxu0 0.0
    %974 = vmatpush1.msra.mxu0 %v145
    %975 = vmatprep.subr.mxu0 0.0
    %976 = vmatpush2.msra.mxu0 0.0
    %977 = vmatprep.subr.mxu0 0.0
    %978 = vmatpush2.msra.mxu0 0.0
    %979 = vmatprep.subr.mxu0 0.0
    %980 = vmatpush2.msra.mxu0 0.0
    %981 = vmatprep.subr.mxu0 0.0
    %982 = vmatpush2.msra.mxu0 0.0
    %983 = vmatprep.subr.mxu0 0.0
    %984 = vmatpush2.msra.mxu0 0.0
    %985 = vmatprep.subr.mxu0 0.0
    %986 = vmatpush2.msra.mxu0 0.0
    %987 = vmatprep.subr.mxu0 0.0
    %988 = vmatpush2.msra.mxu0 0.0
    %989 = vmatprep.subr.mxu0 0.0
    %990 = vmatpush2.msra.mxu0 0.0
    %991 = vmatprep.subr.mxu0 0.0
    %992 = vmatpush2.msra.mxu0 0.0
    %993 = vmatprep.subr.mxu0 0.0
    %994 = vmatpush2.msra.mxu0 0.0
    %995 = vmatprep.subr.mxu0 0.0
    %996 = vmatpush2.msra.mxu0 0.0
    %997 = vmatprep.subr.mxu0 0.0
    %998 = vmatpush2.msra.mxu0 0.0
    %999 = vmatprep.subr.mxu0 0.0
    %1000 = vmatpush2.msra.mxu0 0.0
    %1001 = vmatprep.subr.mxu0 0.0
    %1002 = vmatpush2.msra.mxu0 0.0
    %1003 = vmatprep.subr.mxu0 0.0
    %1004 = vmatpush2.msra.mxu0 0.0
    %1005 = vmatprep.subr.mxu0 0.0
    %1006 = vmatpush2.msra.mxu0 0.0
    %1007 = vmatprep.mubr.f32.mxu0 0.0
    %1008 = vmatmul.mubr.f32.gmra.mxu0 %v781
    %v1009 = vpop.f32.mrf.mxu0
    %v1010 = vadd.f32 0.0, %v1009
    %v1011 = vpop.f32.mrf.mxu0
    %1012 = vdwg.mxu0
    %v1013 = vadd.f32 %v942, %v1010
    %v1014 = vxor.u32 %v1013, 2147483648
    %v1015 = vmul.f32 %v1014, 1.442695
    %v1016 = vpow.pop %v1015
    %v1017 = vadd.f32 %v1016, 1.0
    %v1018 = vrcp.pop %v1017
    %v1019 = vmul.f32 1.0, %v1018
    %v1020 = vtanh.pop %v1013
    %1021 = vrot.lane.b32.xlu0 %v1019, 96
    %v1022 = vpop.permute.xlu0 %1021
    %1023 = vrot.lane.b32.xlu0 %v1020, 64
    %v1024 = vpop.permute.xlu0 %1023
    %1025 = vrot.lane.b32.xlu0 %v1019, 32
    %v1026 = vpop.permute.xlu0 %1025
    %v1027 = vmul.f32 %v1022, %v779
    %v1028 = vmul.f32 %v1019, %v1024
    %v1029 = vadd.f32 %v1027, %v1028
    %v1030 = vtanh.pop %v1029
    %v1031 = vmul.f32 %v1026, %v1030
    %1032 = vmatprep.subr.mxu0 0.0
    %1033 = vmatpush1.msra.mxu0 %v265
    %1034 = vmatprep.subr.mxu0 0.0
    %1035 = vmatpush1.msra.mxu0 %v264
    %1036 = vmatprep.subr.mxu0 0.0
    %1037 = vmatpush1.msra.mxu0 %v263
    %1038 = vmatprep.subr.mxu0 0.0
    %1039 = vmatpush1.msra.mxu0 %v262
    %1040 = vmatprep.subr.mxu0 0.0
    %1041 = vmatpush1.msra.mxu0 %v261
    %1042 = vmatprep.subr.mxu0 0.0
    %1043 = vmatpush1.msra.mxu0 %v260
    %1044 = vmatprep.subr.mxu0 0.0
    %1045 = vmatpush1.msra.mxu0 %v259
    %1046 = vmatprep.subr.mxu0 0.0
    %1047 = vmatpush1.msra.mxu0 %v258
    %1048 = vmatprep.subr.mxu0 0.0
    %1049 = vmatpush1.msra.mxu0 %v257
    %1050 = vmatprep.subr.mxu0 0.0
    %1051 = vmatpush1.msra.mxu0 %v256
    %1052 = vmatprep.subr.mxu0 0.0
    %1053 = vmatpush1.msra.mxu0 %v255
    %1054 = vmatprep.subr.mxu0 0.0
    %1055 = vmatpush1.msra.mxu0 %v254
    %1056 = vmatprep.subr.mxu0 0.0
    %1057 = vmatpush1.msra.mxu0 %v253
    %1058 = vmatprep.subr.mxu0 0.0
    %1059 = vmatpush1.msra.mxu0 %v252
    %1060 = vmatprep.subr.mxu0 0.0
    %1061 = vmatpush1.msra.mxu0 %v251
    %1062 = vmatprep.subr.mxu0 0.0
    %1063 = vmatpush1.msra.mxu0 %v250
    %1064 = vmatprep.subr.mxu0 0.0
    %1065 = vmatpush2.msra.mxu0 0.0
    %1066 = vmatprep.subr.mxu0 0.0
    %1067 = vmatpush2.msra.mxu0 0.0
    %1068 = vmatprep.subr.mxu0 0.0
    %1069 = vmatpush2.msra.mxu0 0.0
    %1070 = vmatprep.subr.mxu0 0.0
    %1071 = vmatpush2.msra.mxu0 0.0
    %1072 = vmatprep.subr.mxu0 0.0
    %1073 = vmatpush2.msra.mxu0 0.0
    %1074 = vmatprep.subr.mxu0 0.0
    %1075 = vmatpush2.msra.mxu0 0.0
    %1076 = vmatprep.subr.mxu0 0.0
    %1077 = vmatpush2.msra.mxu0 0.0
    %1078 = vmatprep.subr.mxu0 0.0
    %1079 = vmatpush2.msra.mxu0 0.0
    %1080 = vmatprep.subr.mxu0 0.0
    %1081 = vmatpush2.msra.mxu0 0.0
    %1082 = vmatprep.subr.mxu0 0.0
    %1083 = vmatpush2.msra.mxu0 0.0
    %1084 = vmatprep.subr.mxu0 0.0
    %1085 = vmatpush2.msra.mxu0 0.0
    %1086 = vmatprep.subr.mxu0 0.0
    %1087 = vmatpush2.msra.mxu0 0.0
    %1088 = vmatprep.subr.mxu0 0.0
    %1089 = vmatpush2.msra.mxu0 0.0
    %1090 = vmatprep.subr.mxu0 0.0
    %1091 = vmatpush2.msra.mxu0 0.0
    %1092 = vmatprep.subr.mxu0 0.0
    %1093 = vmatpush2.msra.mxu0 0.0
    %1094 = vmatprep.subr.mxu0 0.0
    %1095 = vmatpush2.msra.mxu0 0.0
    %1096 = vmatprep.mubr.f32.mxu0 0.0
    %1097 = vmatmul.mubr.f32.gmra.mxu0 %v1031
    %v1098 = vpop.f32.mrf.mxu0
    %v1099 = vadd.f32 0.0, %v1098
    %v1100 = vpop.f32.mrf.mxu0
    %1101 = vdwg.mxu0
    %v1102 = vadd.f32 %v941, %v1099
    %v1103 = vxor.u32 %v1102, 2147483648
    %v1104 = vmul.f32 %v1103, 1.442695
    %v1105 = vpow.pop %v1104
    %v1106 = vadd.f32 %v1105, 1.0
    %v1107 = vrcp.pop %v1106
    %v1108 = vmul.f32 1.0, %v1107
    %v1109 = vtanh.pop %v1102
    %1110 = vrot.lane.b32.xlu0 %v1108, 96
    %v1111 = vpop.permute.xlu0 %1110
    %1112 = vrot.lane.b32.xlu0 %v1109, 64
    %v1113 = vpop.permute.xlu0 %1112
    %1114 = vrot.lane.b32.xlu0 %v1108, 32
    %v1115 = vpop.permute.xlu0 %1114
    %v1116 = vmul.f32 %v1111, %v868
    %v1117 = vmul.f32 %v1108, %v1113
    %v1118 = vadd.f32 %v1116, %v1117
    %v1119 = vtanh.pop %v1118
    %v1120 = vmul.f32 %v1115, %v1119
    %1121 = vmatprep.subr.mxu0 0.0
    %1122 = vmatpush1.msra.mxu0 %v370
    %1123 = vmatprep.subr.mxu0 0.0
    %1124 = vmatpush1.msra.mxu0 %v369
    %1125 = vmatprep.subr.mxu0 0.0
    %1126 = vmatpush1.msra.mxu0 %v368
    %1127 = vmatprep.subr.mxu0 0.0
    %1128 = vmatpush1.msra.mxu0 %v367
    %1129 = vmatprep.subr.mxu0 0.0
    %1130 = vmatpush1.msra.mxu0 %v366
    %1131 = vmatprep.subr.mxu0 0.0
    %1132 = vmatpush1.msra.mxu0 %v365
    %1133 = vmatprep.subr.mxu0 0.0
    %1134 = vmatpush1.msra.mxu0 %v364
    %1135 = vmatprep.subr.mxu0 0.0
    %1136 = vmatpush1.msra.mxu0 %v363
    %1137 = vmatprep.subr.mxu0 0.0
    %1138 = vmatpush1.msra.mxu0 %v362
    %1139 = vmatprep.subr.mxu0 0.0
    %1140 = vmatpush1.msra.mxu0 %v361
    %1141 = vmatprep.subr.mxu0 0.0
    %1142 = vmatpush1.msra.mxu0 %v360
    %1143 = vmatprep.subr.mxu0 0.0
    %1144 = vmatpush1.msra.mxu0 %v359
    %1145 = vmatprep.subr.mxu0 0.0
    %1146 = vmatpush1.msra.mxu0 %v358
    %1147 = vmatprep.subr.mxu0 0.0
    %1148 = vmatpush1.msra.mxu0 %v357
    %1149 = vmatprep.subr.mxu0 0.0
    %1150 = vmatpush1.msra.mxu0 %v356
    %1151 = vmatprep.subr.mxu0 0.0
    %1152 = vmatpush1.msra.mxu0 %v355
    %1153 = vmatprep.subr.mxu0 0.0
    %1154 = vmatpush2.msra.mxu0 0.0
    %1155 = vmatprep.subr.mxu0 0.0
    %1156 = vmatpush2.msra.mxu0 0.0
    %1157 = vmatprep.subr.mxu0 0.0
    %1158 = vmatpush2.msra.mxu0 0.0
    %1159 = vmatprep.subr.mxu0 0.0
    %1160 = vmatpush2.msra.mxu0 0.0
    %1161 = vmatprep.subr.mxu0 0.0
    %1162 = vmatpush2.msra.mxu0 0.0
    %1163 = vmatprep.subr.mxu0 0.0
    %1164 = vmatpush2.msra.mxu0 0.0
    %1165 = vmatprep.subr.mxu0 0.0
    %1166 = vmatpush2.msra.mxu0 0.0
    %1167 = vmatprep.subr.mxu0 0.0
    %1168 = vmatpush2.msra.mxu0 0.0
    %1169 = vmatprep.subr.mxu0 0.0
    %1170 = vmatpush2.msra.mxu0 0.0
    %1171 = vmatprep.subr.mxu0 0.0
    %1172 = vmatpush2.msra.mxu0 0.0
    %1173 = vmatprep.subr.mxu0 0.0
    %1174 = vmatpush2.msra.mxu0 0.0
    %1175 = vmatprep.subr.mxu0 0.0
    %1176 = vmatpush2.msra.mxu0 0.0
    %1177 = vmatprep.subr.mxu0 0.0
    %1178 = vmatpush2.msra.mxu0 0.0
    %1179 = vmatprep.subr.mxu0 0.0
    %1180 = vmatpush2.msra.mxu0 0.0
    %1181 = vmatprep.subr.mxu0 0.0
    %1182 = vmatpush2.msra.mxu0 0.0
    %1183 = vmatprep.subr.mxu0 0.0
    %1184 = vmatpush2.msra.mxu0 0.0
    %1185 = vmatprep.mubr.f32.mxu0 0.0
    %1186 = vmatmul.mubr.f32.gmra.mxu0 %v1120
    %v1187 = vpop.f32.mrf.mxu0
    %v1188 = vadd.f32 0.0, %v1187
    %v1189 = vpop.f32.mrf.mxu0
    %1190 = vdwg.mxu0
    %v1191 = vadd.f32 %v53, %v1188
    %v1192 = vld [vmem:[#allocation2 + $0x4] sm:$0x1]
    %1193 = vmatprep.subr.mxu0 0.0
    %1194 = vmatpush1.msra.mxu0 %v160
    %1195 = vmatprep.subr.mxu0 0.0
    %1196 = vmatpush1.msra.mxu0 %v159
    %1197 = vmatprep.subr.mxu0 0.0
    %1198 = vmatpush1.msra.mxu0 %v158
    %1199 = vmatprep.subr.mxu0 0.0
    %1200 = vmatpush1.msra.mxu0 %v157
    %1201 = vmatprep.subr.mxu0 0.0
    %1202 = vmatpush1.msra.mxu0 %v156
    %1203 = vmatprep.subr.mxu0 0.0
    %1204 = vmatpush1.msra.mxu0 %v155
    %1205 = vmatprep.subr.mxu0 0.0
    %1206 = vmatpush1.msra.mxu0 %v154
    %1207 = vmatprep.subr.mxu0 0.0
    %1208 = vmatpush1.msra.mxu0 %v153
    %1209 = vmatprep.subr.mxu0 0.0
    %1210 = vmatpush1.msra.mxu0 %v152
    %1211 = vmatprep.subr.mxu0 0.0
    %1212 = vmatpush1.msra.mxu0 %v151
    %1213 = vmatprep.subr.mxu0 0.0
    %1214 = vmatpush1.msra.mxu0 %v150
    %1215 = vmatprep.subr.mxu0 0.0
    %1216 = vmatpush1.msra.mxu0 %v149
    %1217 = vmatprep.subr.mxu0 0.0
    %1218 = vmatpush1.msra.mxu0 %v148
    %1219 = vmatprep.subr.mxu0 0.0
    %1220 = vmatpush1.msra.mxu0 %v147
    %1221 = vmatprep.subr.mxu0 0.0
    %1222 = vmatpush1.msra.mxu0 %v146
    %1223 = vmatprep.subr.mxu0 0.0
    %1224 = vmatpush1.msra.mxu0 %v145
    %1225 = vmatprep.subr.mxu0 0.0
    %1226 = vmatpush2.msra.mxu0 0.0
    %1227 = vmatprep.subr.mxu0 0.0
    %1228 = vmatpush2.msra.mxu0 0.0
    %1229 = vmatprep.subr.mxu0 0.0
    %1230 = vmatpush2.msra.mxu0 0.0
    %1231 = vmatprep.subr.mxu0 0.0
    %1232 = vmatpush2.msra.mxu0 0.0
    %1233 = vmatprep.subr.mxu0 0.0
    %1234 = vmatpush2.msra.mxu0 0.0
    %1235 = vmatprep.subr.mxu0 0.0
    %1236 = vmatpush2.msra.mxu0 0.0
    %1237 = vmatprep.subr.mxu0 0.0
    %1238 = vmatpush2.msra.mxu0 0.0
    %1239 = vmatprep.subr.mxu0 0.0
    %1240 = vmatpush2.msra.mxu0 0.0
    %1241 = vmatprep.subr.mxu0 0.0
    %1242 = vmatpush2.msra.mxu0 0.0
    %1243 = vmatprep.subr.mxu0 0.0
    %1244 = vmatpush2.msra.mxu0 0.0
    %1245 = vmatprep.subr.mxu0 0.0
    %1246 = vmatpush2.msra.mxu0 0.0
    %1247 = vmatprep.subr.mxu0 0.0
    %1248 = vmatpush2.msra.mxu0 0.0
    %1249 = vmatprep.subr.mxu0 0.0
    %1250 = vmatpush2.msra.mxu0 0.0
    %1251 = vmatprep.subr.mxu0 0.0
    %1252 = vmatpush2.msra.mxu0 0.0
    %1253 = vmatprep.subr.mxu0 0.0
    %1254 = vmatpush2.msra.mxu0 0.0
    %1255 = vmatprep.subr.mxu0 0.0
    %1256 = vmatpush2.msra.mxu0 0.0
    %1257 = vmatprep.mubr.f32.mxu0 0.0
    %1258 = vmatmul.mubr.f32.gmra.mxu0 %v1031
    %v1259 = vpop.f32.mrf.mxu0
    %v1260 = vadd.f32 0.0, %v1259
    %v1261 = vpop.f32.mrf.mxu0
    %1262 = vdwg.mxu0
    %v1263 = vadd.f32 %v1192, %v1260
    %v1264 = vxor.u32 %v1263, 2147483648
    %v1265 = vmul.f32 %v1264, 1.442695
    %v1266 = vpow.pop %v1265
    %v1267 = vadd.f32 %v1266, 1.0
    %v1268 = vrcp.pop %v1267
    %v1269 = vmul.f32 1.0, %v1268
    %v1270 = vtanh.pop %v1263
    %1271 = vrot.lane.b32.xlu0 %v1269, 96
    %v1272 = vpop.permute.xlu0 %1271
    %1273 = vrot.lane.b32.xlu0 %v1270, 64
    %v1274 = vpop.permute.xlu0 %1273
    %1275 = vrot.lane.b32.xlu0 %v1269, 32
    %v1276 = vpop.permute.xlu0 %1275
    %v1277 = vmul.f32 %v1272, %v1029
    %v1278 = vmul.f32 %v1269, %v1274
    %v1279 = vadd.f32 %v1277, %v1278
    %v1280 = vtanh.pop %v1279
    %v1281 = vmul.f32 %v1276, %v1280
    %1282 = vmatprep.subr.mxu0 0.0
    %1283 = vmatpush1.msra.mxu0 %v265
    %1284 = vmatprep.subr.mxu0 0.0
    %1285 = vmatpush1.msra.mxu0 %v264
    %1286 = vmatprep.subr.mxu0 0.0
    %1287 = vmatpush1.msra.mxu0 %v263
    %1288 = vmatprep.subr.mxu0 0.0
    %1289 = vmatpush1.msra.mxu0 %v262
    %1290 = vmatprep.subr.mxu0 0.0
    %1291 = vmatpush1.msra.mxu0 %v261
    %1292 = vmatprep.subr.mxu0 0.0
    %1293 = vmatpush1.msra.mxu0 %v260
    %1294 = vmatprep.subr.mxu0 0.0
    %1295 = vmatpush1.msra.mxu0 %v259
    %1296 = vmatprep.subr.mxu0 0.0
    %1297 = vmatpush1.msra.mxu0 %v258
    %1298 = vmatprep.subr.mxu0 0.0
    %1299 = vmatpush1.msra.mxu0 %v257
    %1300 = vmatprep.subr.mxu0 0.0
    %1301 = vmatpush1.msra.mxu0 %v256
    %1302 = vmatprep.subr.mxu0 0.0
    %1303 = vmatpush1.msra.mxu0 %v255
    %1304 = vmatprep.subr.mxu0 0.0
    %1305 = vmatpush1.msra.mxu0 %v254
    %1306 = vmatprep.subr.mxu0 0.0
    %1307 = vmatpush1.msra.mxu0 %v253
    %1308 = vmatprep.subr.mxu0 0.0
    %1309 = vmatpush1.msra.mxu0 %v252
    %1310 = vmatprep.subr.mxu0 0.0
    %1311 = vmatpush1.msra.mxu0 %v251
    %1312 = vmatprep.subr.mxu0 0.0
    %1313 = vmatpush1.msra.mxu0 %v250
    %1314 = vmatprep.subr.mxu0 0.0
    %1315 = vmatpush2.msra.mxu0 0.0
    %1316 = vmatprep.subr.mxu0 0.0
    %1317 = vmatpush2.msra.mxu0 0.0
    %1318 = vmatprep.subr.mxu0 0.0
    %1319 = vmatpush2.msra.mxu0 0.0
    %1320 = vmatprep.subr.mxu0 0.0
    %1321 = vmatpush2.msra.mxu0 0.0
    %1322 = vmatprep.subr.mxu0 0.0
    %1323 = vmatpush2.msra.mxu0 0.0
    %1324 = vmatprep.subr.mxu0 0.0
    %1325 = vmatpush2.msra.mxu0 0.0
    %1326 = vmatprep.subr.mxu0 0.0
    %1327 = vmatpush2.msra.mxu0 0.0
    %1328 = vmatprep.subr.mxu0 0.0
    %1329 = vmatpush2.msra.mxu0 0.0
    %1330 = vmatprep.subr.mxu0 0.0
    %1331 = vmatpush2.msra.mxu0 0.0
    %1332 = vmatprep.subr.mxu0 0.0
    %1333 = vmatpush2.msra.mxu0 0.0
    %1334 = vmatprep.subr.mxu0 0.0
    %1335 = vmatpush2.msra.mxu0 0.0
    %1336 = vmatprep.subr.mxu0 0.0
    %1337 = vmatpush2.msra.mxu0 0.0
    %1338 = vmatprep.subr.mxu0 0.0
    %1339 = vmatpush2.msra.mxu0 0.0
    %1340 = vmatprep.subr.mxu0 0.0
    %1341 = vmatpush2.msra.mxu0 0.0
    %1342 = vmatprep.subr.mxu0 0.0
    %1343 = vmatpush2.msra.mxu0 0.0
    %1344 = vmatprep.subr.mxu0 0.0
    %1345 = vmatpush2.msra.mxu0 0.0
    %1346 = vmatprep.mubr.f32.mxu0 0.0
    %1347 = vmatmul.mubr.f32.gmra.mxu0 %v1281
    %v1348 = vpop.f32.mrf.mxu0
    %v1349 = vadd.f32 0.0, %v1348
    %v1350 = vpop.f32.mrf.mxu0
    %1351 = vdwg.mxu0
    %v1352 = vadd.f32 %v1191, %v1349
    %v1353 = vxor.u32 %v1352, 2147483648
    %v1354 = vmul.f32 %v1353, 1.442695
    %v1355 = vpow.pop %v1354
    %v1356 = vadd.f32 %v1355, 1.0
    %v1357 = vrcp.pop %v1356
    %v1358 = vmul.f32 1.0, %v1357
    %v1359 = vtanh.pop %v1352
    %1360 = vrot.lane.b32.xlu0 %v1358, 96
    %v1361 = vpop.permute.xlu0 %1360
    %1362 = vrot.lane.b32.xlu0 %v1359, 64
    %v1363 = vpop.permute.xlu0 %1362
    %1364 = vrot.lane.b32.xlu0 %v1358, 32
    %v1365 = vpop.permute.xlu0 %1364
    %v1366 = vmul.f32 %v1361, %v1118
    %v1367 = vmul.f32 %v1358, %v1363
    %v1368 = vadd.f32 %v1366, %v1367
    %v1369 = vtanh.pop %v1368
    %v1370 = vmul.f32 %v1365, %v1369
    %1371 = vmatprep.subr.mxu0 0.0
    %1372 = vmatpush1.msra.mxu0 %v370
    %1373 = vmatprep.subr.mxu0 0.0
    %1374 = vmatpush1.msra.mxu0 %v369
    %1375 = vmatprep.subr.mxu0 0.0
    %1376 = vmatpush1.msra.mxu0 %v368
    %1377 = vmatprep.subr.mxu0 0.0
    %1378 = vmatpush1.msra.mxu0 %v367
    %1379 = vmatprep.subr.mxu0 0.0
    %1380 = vmatpush1.msra.mxu0 %v366
    %1381 = vmatprep.subr.mxu0 0.0
    %1382 = vmatpush1.msra.mxu0 %v365
    %1383 = vmatprep.subr.mxu0 0.0
    %1384 = vmatpush1.msra.mxu0 %v364
    %1385 = vmatprep.subr.mxu0 0.0
    %1386 = vmatpush1.msra.mxu0 %v363
    %1387 = vmatprep.subr.mxu0 0.0
    %1388 = vmatpush1.msra.mxu0 %v362
    %1389 = vmatprep.subr.mxu0 0.0
    %1390 = vmatpush1.msra.mxu0 %v361
    %1391 = vmatprep.subr.mxu0 0.0
    %1392 = vmatpush1.msra.mxu0 %v360
    %1393 = vmatprep.subr.mxu0 0.0
    %1394 = vmatpush1.msra.mxu0 %v359
    %1395 = vmatprep.subr.mxu0 0.0
    %1396 = vmatpush1.msra.mxu0 %v358
    %1397 = vmatprep.subr.mxu0 0.0
    %1398 = vmatpush1.msra.mxu0 %v357
    %1399 = vmatprep.subr.mxu0 0.0
    %1400 = vmatpush1.msra.mxu0 %v356
    %1401 = vmatprep.subr.mxu0 0.0
    %1402 = vmatpush1.msra.mxu0 %v355
    %1403 = vmatprep.subr.mxu0 0.0
    %1404 = vmatpush2.msra.mxu0 0.0
    %1405 = vmatprep.subr.mxu0 0.0
    %1406 = vmatpush2.msra.mxu0 0.0
    %1407 = vmatprep.subr.mxu0 0.0
    %1408 = vmatpush2.msra.mxu0 0.0
    %1409 = vmatprep.subr.mxu0 0.0
    %1410 = vmatpush2.msra.mxu0 0.0
    %1411 = vmatprep.subr.mxu0 0.0
    %1412 = vmatpush2.msra.mxu0 0.0
    %1413 = vmatprep.subr.mxu0 0.0
    %1414 = vmatpush2.msra.mxu0 0.0
    %1415 = vmatprep.subr.mxu0 0.0
    %1416 = vmatpush2.msra.mxu0 0.0
    %1417 = vmatprep.subr.mxu0 0.0
    %1418 = vmatpush2.msra.mxu0 0.0
    %1419 = vmatprep.subr.mxu0 0.0
    %1420 = vmatpush2.msra.mxu0 0.0
    %1421 = vmatprep.subr.mxu0 0.0
    %1422 = vmatpush2.msra.mxu0 0.0
    %1423 = vmatprep.subr.mxu0 0.0
    %1424 = vmatpush2.msra.mxu0 0.0
    %1425 = vmatprep.subr.mxu0 0.0
    %1426 = vmatpush2.msra.mxu0 0.0
    %1427 = vmatprep.subr.mxu0 0.0
    %1428 = vmatpush2.msra.mxu0 0.0
    %1429 = vmatprep.subr.mxu0 0.0
    %1430 = vmatpush2.msra.mxu0 0.0
    %1431 = vmatprep.subr.mxu0 0.0
    %1432 = vmatpush2.msra.mxu0 0.0
    %1433 = vmatprep.subr.mxu0 0.0
    %1434 = vmatpush2.msra.mxu0 0.0
    %1435 = vmatprep.mubr.f32.mxu0 0.0
    %1436 = vmatmul.mubr.f32.gmra.mxu0 %v1370
    %v1437 = vpop.f32.mrf.mxu0
    %v1438 = vadd.f32 0.0, %v1437
    %v1439 = vpop.f32.mrf.mxu0
    %1440 = vdwg.mxu0
    %v1441 = vadd.f32 %v53, %v1438
    %v1442 = vld [vmem:[#allocation2 + $0x5] sm:$0x1]
    %1443 = vmatprep.subr.mxu0 0.0
    %1444 = vmatpush1.msra.mxu0 %v160
    %1445 = vmatprep.subr.mxu0 0.0
    %1446 = vmatpush1.msra.mxu0 %v159
    %1447 = vmatprep.subr.mxu0 0.0
    %1448 = vmatpush1.msra.mxu0 %v158
    %1449 = vmatprep.subr.mxu0 0.0
    %1450 = vmatpush1.msra.mxu0 %v157
    %1451 = vmatprep.subr.mxu0 0.0
    %1452 = vmatpush1.msra.mxu0 %v156
    %1453 = vmatprep.subr.mxu0 0.0
    %1454 = vmatpush1.msra.mxu0 %v155
    %1455 = vmatprep.subr.mxu0 0.0
    %1456 = vmatpush1.msra.mxu0 %v154
    %1457 = vmatprep.subr.mxu0 0.0
    %1458 = vmatpush1.msra.mxu0 %v153
    %1459 = vmatprep.subr.mxu0 0.0
    %1460 = vmatpush1.msra.mxu0 %v152
    %1461 = vmatprep.subr.mxu0 0.0
    %1462 = vmatpush1.msra.mxu0 %v151
    %1463 = vmatprep.subr.mxu0 0.0
    %1464 = vmatpush1.msra.mxu0 %v150
    %1465 = vmatprep.subr.mxu0 0.0
    %1466 = vmatpush1.msra.mxu0 %v149
    %1467 = vmatprep.subr.mxu0 0.0
    %1468 = vmatpush1.msra.mxu0 %v148
    %1469 = vmatprep.subr.mxu0 0.0
    %1470 = vmatpush1.msra.mxu0 %v147
    %1471 = vmatprep.subr.mxu0 0.0
    %1472 = vmatpush1.msra.mxu0 %v146
    %1473 = vmatprep.subr.mxu0 0.0
    %1474 = vmatpush1.msra.mxu0 %v145
    %1475 = vmatprep.subr.mxu0 0.0
    %1476 = vmatpush2.msra.mxu0 0.0
    %1477 = vmatprep.subr.mxu0 0.0
    %1478 = vmatpush2.msra.mxu0 0.0
    %1479 = vmatprep.subr.mxu0 0.0
    %1480 = vmatpush2.msra.mxu0 0.0
    %1481 = vmatprep.subr.mxu0 0.0
    %1482 = vmatpush2.msra.mxu0 0.0
    %1483 = vmatprep.subr.mxu0 0.0
    %1484 = vmatpush2.msra.mxu0 0.0
    %1485 = vmatprep.subr.mxu0 0.0
    %1486 = vmatpush2.msra.mxu0 0.0
    %1487 = vmatprep.subr.mxu0 0.0
    %1488 = vmatpush2.msra.mxu0 0.0
    %1489 = vmatprep.subr.mxu0 0.0
    %1490 = vmatpush2.msra.mxu0 0.0
    %1491 = vmatprep.subr.mxu0 0.0
    %1492 = vmatpush2.msra.mxu0 0.0
    %1493 = vmatprep.subr.mxu0 0.0
    %1494 = vmatpush2.msra.mxu0 0.0
    %1495 = vmatprep.subr.mxu0 0.0
    %1496 = vmatpush2.msra.mxu0 0.0
    %1497 = vmatprep.subr.mxu0 0.0
    %1498 = vmatpush2.msra.mxu0 0.0
    %1499 = vmatprep.subr.mxu0 0.0
    %1500 = vmatpush2.msra.mxu0 0.0
    %1501 = vmatprep.subr.mxu0 0.0
    %1502 = vmatpush2.msra.mxu0 0.0
    %1503 = vmatprep.subr.mxu0 0.0
    %1504 = vmatpush2.msra.mxu0 0.0
    %1505 = vmatprep.subr.mxu0 0.0
    %1506 = vmatpush2.msra.mxu0 0.0
    %1507 = vmatprep.mubr.f32.mxu0 0.0
    %1508 = vmatmul.mubr.f32.gmra.mxu0 %v1281
    %v1509 = vpop.f32.mrf.mxu0
    %v1510 = vadd.f32 0.0, %v1509
    %v1511 = vpop.f32.mrf.mxu0
    %1512 = vdwg.mxu0
    %v1513 = vadd.f32 %v1442, %v1510
    %v1514 = vxor.u32 %v1513, 2147483648
    %v1515 = vmul.f32 %v1514, 1.442695
    %v1516 = vpow.pop %v1515
    %v1517 = vadd.f32 %v1516, 1.0
    %v1518 = vrcp.pop %v1517
    %v1519 = vmul.f32 1.0, %v1518
    %v1520 = vtanh.pop %v1513
    %1521 = vrot.lane.b32.xlu0 %v1519, 96
    %v1522 = vpop.permute.xlu0 %1521
    %1523 = vrot.lane.b32.xlu0 %v1520, 64
    %v1524 = vpop.permute.xlu0 %1523
    %1525 = vrot.lane.b32.xlu0 %v1519, 32
    %v1526 = vpop.permute.xlu0 %1525
    %v1527 = vmul.f32 %v1522, %v1279
    %v1528 = vmul.f32 %v1519, %v1524
    %v1529 = vadd.f32 %v1527, %v1528
    %v1530 = vtanh.pop %v1529
    %v1531 = vmul.f32 %v1526, %v1530
    %1532 = vmatprep.subr.mxu0 0.0
    %1533 = vmatpush1.msra.mxu0 %v265
    %1534 = vmatprep.subr.mxu0 0.0
    %1535 = vmatpush1.msra.mxu0 %v264
    %1536 = vmatprep.subr.mxu0 0.0
    %1537 = vmatpush1.msra.mxu0 %v263
    %1538 = vmatprep.subr.mxu0 0.0
    %1539 = vmatpush1.msra.mxu0 %v262
    %1540 = vmatprep.subr.mxu0 0.0
    %1541 = vmatpush1.msra.mxu0 %v261
    %1542 = vmatprep.subr.mxu0 0.0
    %1543 = vmatpush1.msra.mxu0 %v260
    %1544 = vmatprep.subr.mxu0 0.0
    %1545 = vmatpush1.msra.mxu0 %v259
    %1546 = vmatprep.subr.mxu0 0.0
    %1547 = vmatpush1.msra.mxu0 %v258
    %1548 = vmatprep.subr.mxu0 0.0
    %1549 = vmatpush1.msra.mxu0 %v257
    %1550 = vmatprep.subr.mxu0 0.0
    %1551 = vmatpush1.msra.mxu0 %v256
    %1552 = vmatprep.subr.mxu0 0.0
    %1553 = vmatpush1.msra.mxu0 %v255
    %1554 = vmatprep.subr.mxu0 0.0
    %1555 = vmatpush1.msra.mxu0 %v254
    %1556 = vmatprep.subr.mxu0 0.0
    %1557 = vmatpush1.msra.mxu0 %v253
    %1558 = vmatprep.subr.mxu0 0.0
    %1559 = vmatpush1.msra.mxu0 %v252
    %1560 = vmatprep.subr.mxu0 0.0
    %1561 = vmatpush1.msra.mxu0 %v251
    %1562 = vmatprep.subr.mxu0 0.0
    %1563 = vmatpush1.msra.mxu0 %v250
    %1564 = vmatprep.subr.mxu0 0.0
    %1565 = vmatpush2.msra.mxu0 0.0
    %1566 = vmatprep.subr.mxu0 0.0
    %1567 = vmatpush2.msra.mxu0 0.0
    %1568 = vmatprep.subr.mxu0 0.0
    %1569 = vmatpush2.msra.mxu0 0.0
    %1570 = vmatprep.subr.mxu0 0.0
    %1571 = vmatpush2.msra.mxu0 0.0
    %1572 = vmatprep.subr.mxu0 0.0
    %1573 = vmatpush2.msra.mxu0 0.0
    %1574 = vmatprep.subr.mxu0 0.0
    %1575 = vmatpush2.msra.mxu0 0.0
    %1576 = vmatprep.subr.mxu0 0.0
    %1577 = vmatpush2.msra.mxu0 0.0
    %1578 = vmatprep.subr.mxu0 0.0
    %1579 = vmatpush2.msra.mxu0 0.0
    %1580 = vmatprep.subr.mxu0 0.0
    %1581 = vmatpush2.msra.mxu0 0.0
    %1582 = vmatprep.subr.mxu0 0.0
    %1583 = vmatpush2.msra.mxu0 0.0
    %1584 = vmatprep.subr.mxu0 0.0
    %1585 = vmatpush2.msra.mxu0 0.0
    %1586 = vmatprep.subr.mxu0 0.0
    %1587 = vmatpush2.msra.mxu0 0.0
    %1588 = vmatprep.subr.mxu0 0.0
    %1589 = vmatpush2.msra.mxu0 0.0
    %1590 = vmatprep.subr.mxu0 0.0
    %1591 = vmatpush2.msra.mxu0 0.0
    %1592 = vmatprep.subr.mxu0 0.0
    %1593 = vmatpush2.msra.mxu0 0.0
    %1594 = vmatprep.subr.mxu0 0.0
    %1595 = vmatpush2.msra.mxu0 0.0
    %1596 = vmatprep.mubr.f32.mxu0 0.0
    %1597 = vmatmul.mubr.f32.gmra.mxu0 %v1531
    %v1598 = vpop.f32.mrf.mxu0
    %v1599 = vadd.f32 0.0, %v1598
    %v1600 = vpop.f32.mrf.mxu0
    %1601 = vdwg.mxu0
    %v1602 = vadd.f32 %v1441, %v1599
    %v1603 = vxor.u32 %v1602, 2147483648
    %v1604 = vmul.f32 %v1603, 1.442695
    %v1605 = vpow.pop %v1604
    %v1606 = vadd.f32 %v1605, 1.0
    %v1607 = vrcp.pop %v1606
    %v1608 = vmul.f32 1.0, %v1607
    %v1609 = vtanh.pop %v1602
    %1610 = vrot.lane.b32.xlu0 %v1608, 96
    %v1611 = vpop.permute.xlu0 %1610
    %1612 = vrot.lane.b32.xlu0 %v1609, 64
    %v1613 = vpop.permute.xlu0 %1612
    %1614 = vrot.lane.b32.xlu0 %v1608, 32
    %v1615 = vpop.permute.xlu0 %1614
    %v1616 = vmul.f32 %v1611, %v1368
    %v1617 = vmul.f32 %v1608, %v1613
    %v1618 = vadd.f32 %v1616, %v1617
    %v1619 = vtanh.pop %v1618
    %v1620 = vmul.f32 %v1615, %v1619
    %1621 = vmatprep.subr.mxu0 0.0
    %1622 = vmatpush1.msra.mxu0 %v370
    %1623 = vmatprep.subr.mxu0 0.0
    %1624 = vmatpush1.msra.mxu0 %v369
    %1625 = vmatprep.subr.mxu0 0.0
    %1626 = vmatpush1.msra.mxu0 %v368
    %1627 = vmatprep.subr.mxu0 0.0
    %1628 = vmatpush1.msra.mxu0 %v367
    %1629 = vmatprep.subr.mxu0 0.0
    %1630 = vmatpush1.msra.mxu0 %v366
    %1631 = vmatprep.subr.mxu0 0.0
    %1632 = vmatpush1.msra.mxu0 %v365
    %1633 = vmatprep.subr.mxu0 0.0
    %1634 = vmatpush1.msra.mxu0 %v364
    %1635 = vmatprep.subr.mxu0 0.0
    %1636 = vmatpush1.msra.mxu0 %v363
    %1637 = vmatprep.subr.mxu0 0.0
    %1638 = vmatpush1.msra.mxu0 %v362
    %1639 = vmatprep.subr.mxu0 0.0
    %1640 = vmatpush1.msra.mxu0 %v361
    %1641 = vmatprep.subr.mxu0 0.0
    %1642 = vmatpush1.msra.mxu0 %v360
    %1643 = vmatprep.subr.mxu0 0.0
    %1644 = vmatpush1.msra.mxu0 %v359
    %1645 = vmatprep.subr.mxu0 0.0
    %1646 = vmatpush1.msra.mxu0 %v358
    %1647 = vmatprep.subr.mxu0 0.0
    %1648 = vmatpush1.msra.mxu0 %v357
    %1649 = vmatprep.subr.mxu0 0.0
    %1650 = vmatpush1.msra.mxu0 %v356
    %1651 = vmatprep.subr.mxu0 0.0
    %1652 = vmatpush1.msra.mxu0 %v355
    %1653 = vmatprep.subr.mxu0 0.0
    %1654 = vmatpush2.msra.mxu0 0.0
    %1655 = vmatprep.subr.mxu0 0.0
    %1656 = vmatpush2.msra.mxu0 0.0
    %1657 = vmatprep.subr.mxu0 0.0
    %1658 = vmatpush2.msra.mxu0 0.0
    %1659 = vmatprep.subr.mxu0 0.0
    %1660 = vmatpush2.msra.mxu0 0.0
    %1661 = vmatprep.subr.mxu0 0.0
    %1662 = vmatpush2.msra.mxu0 0.0
    %1663 = vmatprep.subr.mxu0 0.0
    %1664 = vmatpush2.msra.mxu0 0.0
    %1665 = vmatprep.subr.mxu0 0.0
    %1666 = vmatpush2.msra.mxu0 0.0
    %1667 = vmatprep.subr.mxu0 0.0
    %1668 = vmatpush2.msra.mxu0 0.0
    %1669 = vmatprep.subr.mxu0 0.0
    %1670 = vmatpush2.msra.mxu0 0.0
    %1671 = vmatprep.subr.mxu0 0.0
    %1672 = vmatpush2.msra.mxu0 0.0
    %1673 = vmatprep.subr.mxu0 0.0
    %1674 = vmatpush2.msra.mxu0 0.0
    %1675 = vmatprep.subr.mxu0 0.0
    %1676 = vmatpush2.msra.mxu0 0.0
    %1677 = vmatprep.subr.mxu0 0.0
    %1678 = vmatpush2.msra.mxu0 0.0
    %1679 = vmatprep.subr.mxu0 0.0
    %1680 = vmatpush2.msra.mxu0 0.0
    %1681 = vmatprep.subr.mxu0 0.0
    %1682 = vmatpush2.msra.mxu0 0.0
    %1683 = vmatprep.subr.mxu0 0.0
    %1684 = vmatpush2.msra.mxu0 0.0
    %1685 = vmatprep.mubr.f32.mxu0 0.0
    %1686 = vmatmul.mubr.f32.gmra.mxu0 %v1620
    %v1687 = vpop.f32.mrf.mxu0
    %v1688 = vadd.f32 0.0, %v1687
    %v1689 = vpop.f32.mrf.mxu0
    %1690 = vdwg.mxu0
    %v1691 = vadd.f32 %v53, %v1688
    %v1692 = vld [vmem:[#allocation2 + $0x6] sm:$0x1]
    %1693 = vmatprep.subr.mxu0 0.0
    %1694 = vmatpush1.msra.mxu0 %v160
    %1695 = vmatprep.subr.mxu0 0.0
    %1696 = vmatpush1.msra.mxu0 %v159
    %1697 = vmatprep.subr.mxu0 0.0
    %1698 = vmatpush1.msra.mxu0 %v158
    %1699 = vmatprep.subr.mxu0 0.0
    %1700 = vmatpush1.msra.mxu0 %v157
    %1701 = vmatprep.subr.mxu0 0.0
    %1702 = vmatpush1.msra.mxu0 %v156
    %1703 = vmatprep.subr.mxu0 0.0
    %1704 = vmatpush1.msra.mxu0 %v155
    %1705 = vmatprep.subr.mxu0 0.0
    %1706 = vmatpush1.msra.mxu0 %v154
    %1707 = vmatprep.subr.mxu0 0.0
    %1708 = vmatpush1.msra.mxu0 %v153
    %1709 = vmatprep.subr.mxu0 0.0
    %1710 = vmatpush1.msra.mxu0 %v152
    %1711 = vmatprep.subr.mxu0 0.0
    %1712 = vmatpush1.msra.mxu0 %v151
    %1713 = vmatprep.subr.mxu0 0.0
    %1714 = vmatpush1.msra.mxu0 %v150
    %1715 = vmatprep.subr.mxu0 0.0
    %1716 = vmatpush1.msra.mxu0 %v149
    %1717 = vmatprep.subr.mxu0 0.0
    %1718 = vmatpush1.msra.mxu0 %v148
    %1719 = vmatprep.subr.mxu0 0.0
    %1720 = vmatpush1.msra.mxu0 %v147
    %1721 = vmatprep.subr.mxu0 0.0
    %1722 = vmatpush1.msra.mxu0 %v146
    %1723 = vmatprep.subr.mxu0 0.0
    %1724 = vmatpush1.msra.mxu0 %v145
    %1725 = vmatprep.subr.mxu0 0.0
    %1726 = vmatpush2.msra.mxu0 0.0
    %1727 = vmatprep.subr.mxu0 0.0
    %1728 = vmatpush2.msra.mxu0 0.0
    %1729 = vmatprep.subr.mxu0 0.0
    %1730 = vmatpush2.msra.mxu0 0.0
    %1731 = vmatprep.subr.mxu0 0.0
    %1732 = vmatpush2.msra.mxu0 0.0
    %1733 = vmatprep.subr.mxu0 0.0
    %1734 = vmatpush2.msra.mxu0 0.0
    %1735 = vmatprep.subr.mxu0 0.0
    %1736 = vmatpush2.msra.mxu0 0.0
    %1737 = vmatprep.subr.mxu0 0.0
    %1738 = vmatpush2.msra.mxu0 0.0
    %1739 = vmatprep.subr.mxu0 0.0
    %1740 = vmatpush2.msra.mxu0 0.0
    %1741 = vmatprep.subr.mxu0 0.0
    %1742 = vmatpush2.msra.mxu0 0.0
    %1743 = vmatprep.subr.mxu0 0.0
    %1744 = vmatpush2.msra.mxu0 0.0
    %1745 = vmatprep.subr.mxu0 0.0
    %1746 = vmatpush2.msra.mxu0 0.0
    %1747 = vmatprep.subr.mxu0 0.0
    %1748 = vmatpush2.msra.mxu0 0.0
    %1749 = vmatprep.subr.mxu0 0.0
    %1750 = vmatpush2.msra.mxu0 0.0
    %1751 = vmatprep.subr.mxu0 0.0
    %1752 = vmatpush2.msra.mxu0 0.0
    %1753 = vmatprep.subr.mxu0 0.0
    %1754 = vmatpush2.msra.mxu0 0.0
    %1755 = vmatprep.subr.mxu0 0.0
    %1756 = vmatpush2.msra.mxu0 0.0
    %1757 = vmatprep.mubr.f32.mxu0 0.0
    %1758 = vmatmul.mubr.f32.gmra.mxu0 %v1531
    %v1759 = vpop.f32.mrf.mxu0
    %v1760 = vadd.f32 0.0, %v1759
    %v1761 = vpop.f32.mrf.mxu0
    %1762 = vdwg.mxu0
    %v1763 = vadd.f32 %v1692, %v1760
    %v1764 = vxor.u32 %v1763, 2147483648
    %v1765 = vmul.f32 %v1764, 1.442695
    %v1766 = vpow.pop %v1765
    %v1767 = vadd.f32 %v1766, 1.0
    %v1768 = vrcp.pop %v1767
    %v1769 = vmul.f32 1.0, %v1768
    %v1770 = vtanh.pop %v1763
    %1771 = vrot.lane.b32.xlu0 %v1769, 96
    %v1772 = vpop.permute.xlu0 %1771
    %1773 = vrot.lane.b32.xlu0 %v1770, 64
    %v1774 = vpop.permute.xlu0 %1773
    %1775 = vrot.lane.b32.xlu0 %v1769, 32
    %v1776 = vpop.permute.xlu0 %1775
    %v1777 = vmul.f32 %v1772, %v1529
    %v1778 = vmul.f32 %v1769, %v1774
    %v1779 = vadd.f32 %v1777, %v1778
    %v1780 = vtanh.pop %v1779
    %v1781 = vmul.f32 %v1776, %v1780
    %1782 = vmatprep.subr.mxu0 0.0
    %1783 = vmatpush1.msra.mxu0 %v265
    %1784 = vmatprep.subr.mxu0 0.0
    %1785 = vmatpush1.msra.mxu0 %v264
    %1786 = vmatprep.subr.mxu0 0.0
    %1787 = vmatpush1.msra.mxu0 %v263
    %1788 = vmatprep.subr.mxu0 0.0
    %1789 = vmatpush1.msra.mxu0 %v262
    %1790 = vmatprep.subr.mxu0 0.0
    %1791 = vmatpush1.msra.mxu0 %v261
    %1792 = vmatprep.subr.mxu0 0.0
    %1793 = vmatpush1.msra.mxu0 %v260
    %1794 = vmatprep.subr.mxu0 0.0
    %1795 = vmatpush1.msra.mxu0 %v259
    %1796 = vmatprep.subr.mxu0 0.0
    %1797 = vmatpush1.msra.mxu0 %v258
    %1798 = vmatprep.subr.mxu0 0.0
    %1799 = vmatpush1.msra.mxu0 %v257
    %1800 = vmatprep.subr.mxu0 0.0
    %1801 = vmatpush1.msra.mxu0 %v256
    %1802 = vmatprep.subr.mxu0 0.0
    %1803 = vmatpush1.msra.mxu0 %v255
    %1804 = vmatprep.subr.mxu0 0.0
    %1805 = vmatpush1.msra.mxu0 %v254
    %1806 = vmatprep.subr.mxu0 0.0
    %1807 = vmatpush1.msra.mxu0 %v253
    %1808 = vmatprep.subr.mxu0 0.0
    %1809 = vmatpush1.msra.mxu0 %v252
    %1810 = vmatprep.subr.mxu0 0.0
    %1811 = vmatpush1.msra.mxu0 %v251
    %1812 = vmatprep.subr.mxu0 0.0
    %1813 = vmatpush1.msra.mxu0 %v250
    %1814 = vmatprep.subr.mxu0 0.0
    %1815 = vmatpush2.msra.mxu0 0.0
    %1816 = vmatprep.subr.mxu0 0.0
    %1817 = vmatpush2.msra.mxu0 0.0
    %1818 = vmatprep.subr.mxu0 0.0
    %1819 = vmatpush2.msra.mxu0 0.0
    %1820 = vmatprep.subr.mxu0 0.0
    %1821 = vmatpush2.msra.mxu0 0.0
    %1822 = vmatprep.subr.mxu0 0.0
    %1823 = vmatpush2.msra.mxu0 0.0
    %1824 = vmatprep.subr.mxu0 0.0
    %1825 = vmatpush2.msra.mxu0 0.0
    %1826 = vmatprep.subr.mxu0 0.0
    %1827 = vmatpush2.msra.mxu0 0.0
    %1828 = vmatprep.subr.mxu0 0.0
    %1829 = vmatpush2.msra.mxu0 0.0
    %1830 = vmatprep.subr.mxu0 0.0
    %1831 = vmatpush2.msra.mxu0 0.0
    %1832 = vmatprep.subr.mxu0 0.0
    %1833 = vmatpush2.msra.mxu0 0.0
    %1834 = vmatprep.subr.mxu0 0.0
    %1835 = vmatpush2.msra.mxu0 0.0
    %1836 = vmatprep.subr.mxu0 0.0
    %1837 = vmatpush2.msra.mxu0 0.0
    %1838 = vmatprep.subr.mxu0 0.0
    %1839 = vmatpush2.msra.mxu0 0.0
    %1840 = vmatprep.subr.mxu0 0.0
    %1841 = vmatpush2.msra.mxu0 0.0
    %1842 = vmatprep.subr.mxu0 0.0
    %1843 = vmatpush2.msra.mxu0 0.0
    %1844 = vmatprep.subr.mxu0 0.0
    %1845 = vmatpush2.msra.mxu0 0.0
    %1846 = vmatprep.mubr.f32.mxu0 0.0
    %1847 = vmatmul.mubr.f32.gmra.mxu0 %v1781
    %v1848 = vpop.f32.mrf.mxu0
    %v1849 = vadd.f32 0.0, %v1848
    %v1850 = vpop.f32.mrf.mxu0
    %1851 = vdwg.mxu0
    %v1852 = vadd.f32 %v1691, %v1849
    %v1853 = vxor.u32 %v1852, 2147483648
    %v1854 = vmul.f32 %v1853, 1.442695
    %v1855 = vpow.pop %v1854
    %v1856 = vadd.f32 %v1855, 1.0
    %v1857 = vrcp.pop %v1856
    %v1858 = vmul.f32 1.0, %v1857
    %v1859 = vtanh.pop %v1852
    %1860 = vrot.lane.b32.xlu0 %v1858, 96
    %v1861 = vpop.permute.xlu0 %1860
    %1862 = vrot.lane.b32.xlu0 %v1859, 64
    %v1863 = vpop.permute.xlu0 %1862
    %1864 = vrot.lane.b32.xlu0 %v1858, 32
    %v1865 = vpop.permute.xlu0 %1864
    %v1866 = vmul.f32 %v1861, %v1618
    %v1867 = vmul.f32 %v1858, %v1863
    %v1868 = vadd.f32 %v1866, %v1867
    %v1869 = vtanh.pop %v1868
    %v1870 = vmul.f32 %v1865, %v1869
    %1871 = vmatprep.subr.mxu0 0.0
    %1872 = vmatpush1.msra.mxu0 %v370
    %1873 = vmatprep.subr.mxu0 0.0
    %1874 = vmatpush1.msra.mxu0 %v369
    %1875 = vmatprep.subr.mxu0 0.0
    %1876 = vmatpush1.msra.mxu0 %v368
    %1877 = vmatprep.subr.mxu0 0.0
    %1878 = vmatpush1.msra.mxu0 %v367
    %1879 = vmatprep.subr.mxu0 0.0
    %1880 = vmatpush1.msra.mxu0 %v366
    %1881 = vmatprep.subr.mxu0 0.0
    %1882 = vmatpush1.msra.mxu0 %v365
    %1883 = vmatprep.subr.mxu0 0.0
    %1884 = vmatpush1.msra.mxu0 %v364
    %1885 = vmatprep.subr.mxu0 0.0
    %1886 = vmatpush1.msra.mxu0 %v363
    %1887 = vmatprep.subr.mxu0 0.0
    %1888 = vmatpush1.msra.mxu0 %v362
    %1889 = vmatprep.subr.mxu0 0.0
    %1890 = vmatpush1.msra.mxu0 %v361
    %1891 = vmatprep.subr.mxu0 0.0
    %1892 = vmatpush1.msra.mxu0 %v360
    %1893 = vmatprep.subr.mxu0 0.0
    %1894 = vmatpush1.msra.mxu0 %v359
    %1895 = vmatprep.subr.mxu0 0.0
    %1896 = vmatpush1.msra.mxu0 %v358
    %1897 = vmatprep.subr.mxu0 0.0
    %1898 = vmatpush1.msra.mxu0 %v357
    %1899 = vmatprep.subr.mxu0 0.0
    %1900 = vmatpush1.msra.mxu0 %v356
    %1901 = vmatprep.subr.mxu0 0.0
    %1902 = vmatpush1.msra.mxu0 %v355
    %1903 = vmatprep.subr.mxu0 0.0
    %1904 = vmatpush2.msra.mxu0 0.0
    %1905 = vmatprep.subr.mxu0 0.0
    %1906 = vmatpush2.msra.mxu0 0.0
    %1907 = vmatprep.subr.mxu0 0.0
    %1908 = vmatpush2.msra.mxu0 0.0
    %1909 = vmatprep.subr.mxu0 0.0
    %1910 = vmatpush2.msra.mxu0 0.0
    %1911 = vmatprep.subr.mxu0 0.0
    %1912 = vmatpush2.msra.mxu0 0.0
    %1913 = vmatprep.subr.mxu0 0.0
    %1914 = vmatpush2.msra.mxu0 0.0
    %1915 = vmatprep.subr.mxu0 0.0
    %1916 = vmatpush2.msra.mxu0 0.0
    %1917 = vmatprep.subr.mxu0 0.0
    %1918 = vmatpush2.msra.mxu0 0.0
    %1919 = vmatprep.subr.mxu0 0.0
    %1920 = vmatpush2.msra.mxu0 0.0
    %1921 = vmatprep.subr.mxu0 0.0
    %1922 = vmatpush2.msra.mxu0 0.0
    %1923 = vmatprep.subr.mxu0 0.0
    %1924 = vmatpush2.msra.mxu0 0.0
    %1925 = vmatprep.subr.mxu0 0.0
    %1926 = vmatpush2.msra.mxu0 0.0
    %1927 = vmatprep.subr.mxu0 0.0
    %1928 = vmatpush2.msra.mxu0 0.0
    %1929 = vmatprep.subr.mxu0 0.0
    %1930 = vmatpush2.msra.mxu0 0.0
    %1931 = vmatprep.subr.mxu0 0.0
    %1932 = vmatpush2.msra.mxu0 0.0
    %1933 = vmatprep.subr.mxu0 0.0
    %1934 = vmatpush2.msra.mxu0 0.0
    %1935 = vmatprep.mubr.f32.mxu0 0.0
    %1936 = vmatmul.mubr.f32.gmra.mxu0 %v1870
    %v1937 = vpop.f32.mrf.mxu0
    %v1938 = vadd.f32 0.0, %v1937
    %v1939 = vpop.f32.mrf.mxu0
    %1940 = vdwg.mxu0
    %v1941 = vadd.f32 %v53, %v1938
    %v1942 = vld [vmem:[#allocation2 + $0x7] sm:$0x1]
    %1943 = vmatprep.subr.mxu0 0.0
    %1944 = vmatpush1.msra.mxu0 %v160
    %1945 = vmatprep.subr.mxu0 0.0
    %1946 = vmatpush1.msra.mxu0 %v159
    %1947 = vmatprep.subr.mxu0 0.0
    %1948 = vmatpush1.msra.mxu0 %v158
    %1949 = vmatprep.subr.mxu0 0.0
    %1950 = vmatpush1.msra.mxu0 %v157
    %1951 = vmatprep.subr.mxu0 0.0
    %1952 = vmatpush1.msra.mxu0 %v156
    %1953 = vmatprep.subr.mxu0 0.0
    %1954 = vmatpush1.msra.mxu0 %v155
    %1955 = vmatprep.subr.mxu0 0.0
    %1956 = vmatpush1.msra.mxu0 %v154
    %1957 = vmatprep.subr.mxu0 0.0
    %1958 = vmatpush1.msra.mxu0 %v153
    %1959 = vmatprep.subr.mxu0 0.0
    %1960 = vmatpush1.msra.mxu0 %v152
    %1961 = vmatprep.subr.mxu0 0.0
    %1962 = vmatpush1.msra.mxu0 %v151
    %1963 = vmatprep.subr.mxu0 0.0
    %1964 = vmatpush1.msra.mxu0 %v150
    %1965 = vmatprep.subr.mxu0 0.0
    %1966 = vmatpush1.msra.mxu0 %v149
    %1967 = vmatprep.subr.mxu0 0.0
    %1968 = vmatpush1.msra.mxu0 %v148
    %1969 = vmatprep.subr.mxu0 0.0
    %1970 = vmatpush1.msra.mxu0 %v147
    %1971 = vmatprep.subr.mxu0 0.0
    %1972 = vmatpush1.msra.mxu0 %v146
    %1973 = vmatprep.subr.mxu0 0.0
    %1974 = vmatpush1.msra.mxu0 %v145
    %1975 = vmatprep.subr.mxu0 0.0
    %1976 = vmatpush2.msra.mxu0 0.0
    %1977 = vmatprep.subr.mxu0 0.0
    %1978 = vmatpush2.msra.mxu0 0.0
    %1979 = vmatprep.subr.mxu0 0.0
    %1980 = vmatpush2.msra.mxu0 0.0
    %1981 = vmatprep.subr.mxu0 0.0
    %1982 = vmatpush2.msra.mxu0 0.0
    %1983 = vmatprep.subr.mxu0 0.0
    %1984 = vmatpush2.msra.mxu0 0.0
    %1985 = vmatprep.subr.mxu0 0.0
    %1986 = vmatpush2.msra.mxu0 0.0
    %1987 = vmatprep.subr.mxu0 0.0
    %1988 = vmatpush2.msra.mxu0 0.0
    %1989 = vmatprep.subr.mxu0 0.0
    %1990 = vmatpush2.msra.mxu0 0.0
    %1991 = vmatprep.subr.mxu0 0.0
    %1992 = vmatpush2.msra.mxu0 0.0
    %1993 = vmatprep.subr.mxu0 0.0
    %1994 = vmatpush2.msra.mxu0 0.0
    %1995 = vmatprep.subr.mxu0 0.0
    %1996 = vmatpush2.msra.mxu0 0.0
    %1997 = vmatprep.subr.mxu0 0.0
    %1998 = vmatpush2.msra.mxu0 0.0
    %1999 = vmatprep.subr.mxu0 0.0
    %2000 = vmatpush2.msra.mxu0 0.0
    %2001 = vmatprep.subr.mxu0 0.0
    %2002 = vmatpush2.msra.mxu0 0.0
    %2003 = vmatprep.subr.mxu0 0.0
    %2004 = vmatpush2.msra.mxu0 0.0
    %2005 = vmatprep.subr.mxu0 0.0
    %2006 = vmatpush2.msra.mxu0 0.0
    %2007 = vmatprep.mubr.f32.mxu0 0.0
    %2008 = vmatmul.mubr.f32.gmra.mxu0 %v1781
    %v2009 = vpop.f32.mrf.mxu0
    %v2010 = vadd.f32 0.0, %v2009
    %v2011 = vpop.f32.mrf.mxu0
    %2012 = vdwg.mxu0
    %v2013 = vadd.f32 %v1942, %v2010
    %v2014 = vxor.u32 %v2013, 2147483648
    %v2015 = vmul.f32 %v2014, 1.442695
    %v2016 = vpow.pop %v2015
    %v2017 = vadd.f32 %v2016, 1.0
    %v2018 = vrcp.pop %v2017
    %v2019 = vmul.f32 1.0, %v2018
    %v2020 = vtanh.pop %v2013
    %2021 = vrot.lane.b32.xlu0 %v2019, 96
    %v2022 = vpop.permute.xlu0 %2021
    %2023 = vrot.lane.b32.xlu0 %v2020, 64
    %v2024 = vpop.permute.xlu0 %2023
    %2025 = vrot.lane.b32.xlu0 %v2019, 32
    %v2026 = vpop.permute.xlu0 %2025
    %v2027 = vmul.f32 %v2022, %v1779
    %v2028 = vmul.f32 %v2019, %v2024
    %v2029 = vadd.f32 %v2027, %v2028
    %v2030 = vtanh.pop %v2029
    %v2031 = vmul.f32 %v2026, %v2030
    %2032 = vmatprep.subr.mxu0 0.0
    %2033 = vmatpush1.msra.mxu0 %v265
    %2034 = vmatprep.subr.mxu0 0.0
    %2035 = vmatpush1.msra.mxu0 %v264
    %2036 = vmatprep.subr.mxu0 0.0
    %2037 = vmatpush1.msra.mxu0 %v263
    %2038 = vmatprep.subr.mxu0 0.0
    %2039 = vmatpush1.msra.mxu0 %v262
    %2040 = vmatprep.subr.mxu0 0.0
    %2041 = vmatpush1.msra.mxu0 %v261
    %2042 = vmatprep.subr.mxu0 0.0
    %2043 = vmatpush1.msra.mxu0 %v260
    %2044 = vmatprep.subr.mxu0 0.0
    %2045 = vmatpush1.msra.mxu0 %v259
    %2046 = vmatprep.subr.mxu0 0.0
    %2047 = vmatpush1.msra.mxu0 %v258
    %2048 = vmatprep.subr.mxu0 0.0
    %2049 = vmatpush1.msra.mxu0 %v257
    %2050 = vmatprep.subr.mxu0 0.0
    %2051 = vmatpush1.msra.mxu0 %v256
    %2052 = vmatprep.subr.mxu0 0.0
    %2053 = vmatpush1.msra.mxu0 %v255
    %2054 = vmatprep.subr.mxu0 0.0
    %2055 = vmatpush1.msra.mxu0 %v254
    %2056 = vmatprep.subr.mxu0 0.0
    %2057 = vmatpush1.msra.mxu0 %v253
    %2058 = vmatprep.subr.mxu0 0.0
    %2059 = vmatpush1.msra.mxu0 %v252
    %2060 = vmatprep.subr.mxu0 0.0
    %2061 = vmatpush1.msra.mxu0 %v251
    %2062 = vmatprep.subr.mxu0 0.0
    %2063 = vmatpush1.msra.mxu0 %v250
    %2064 = vmatprep.subr.mxu0 0.0
    %2065 = vmatpush2.msra.mxu0 0.0
    %2066 = vmatprep.subr.mxu0 0.0
    %2067 = vmatpush2.msra.mxu0 0.0
    %2068 = vmatprep.subr.mxu0 0.0
    %2069 = vmatpush2.msra.mxu0 0.0
    %2070 = vmatprep.subr.mxu0 0.0
    %2071 = vmatpush2.msra.mxu0 0.0
    %2072 = vmatprep.subr.mxu0 0.0
    %2073 = vmatpush2.msra.mxu0 0.0
    %2074 = vmatprep.subr.mxu0 0.0
    %2075 = vmatpush2.msra.mxu0 0.0
    %2076 = vmatprep.subr.mxu0 0.0
    %2077 = vmatpush2.msra.mxu0 0.0
    %2078 = vmatprep.subr.mxu0 0.0
    %2079 = vmatpush2.msra.mxu0 0.0
    %2080 = vmatprep.subr.mxu0 0.0
    %2081 = vmatpush2.msra.mxu0 0.0
    %2082 = vmatprep.subr.mxu0 0.0
    %2083 = vmatpush2.msra.mxu0 0.0
    %2084 = vmatprep.subr.mxu0 0.0
    %2085 = vmatpush2.msra.mxu0 0.0
    %2086 = vmatprep.subr.mxu0 0.0
    %2087 = vmatpush2.msra.mxu0 0.0
    %2088 = vmatprep.subr.mxu0 0.0
    %2089 = vmatpush2.msra.mxu0 0.0
    %2090 = vmatprep.subr.mxu0 0.0
    %2091 = vmatpush2.msra.mxu0 0.0
    %2092 = vmatprep.subr.mxu0 0.0
    %2093 = vmatpush2.msra.mxu0 0.0
    %2094 = vmatprep.subr.mxu0 0.0
    %2095 = vmatpush2.msra.mxu0 0.0
    %2096 = vmatprep.mubr.f32.mxu0 0.0
    %2097 = vmatmul.mubr.f32.gmra.mxu0 %v2031
    %v2098 = vpop.f32.mrf.mxu0
    %v2099 = vadd.f32 0.0, %v2098
    %v2100 = vpop.f32.mrf.mxu0
    %2101 = vdwg.mxu0
    %v2102 = vadd.f32 %v1941, %v2099
    %v2103 = vxor.u32 %v2102, 2147483648
    %v2104 = vmul.f32 %v2103, 1.442695
    %v2105 = vpow.pop %v2104
    %v2106 = vadd.f32 %v2105, 1.0
    %v2107 = vrcp.pop %v2106
    %v2108 = vmul.f32 1.0, %v2107
    %v2109 = vtanh.pop %v2102
    %2110 = vrot.lane.b32.xlu0 %v2108, 96
    %v2111 = vpop.permute.xlu0 %2110
    %2112 = vrot.lane.b32.xlu0 %v2109, 64
    %v2113 = vpop.permute.xlu0 %2112
    %2114 = vrot.lane.b32.xlu0 %v2108, 32
    %v2115 = vpop.permute.xlu0 %2114
    %v2116 = vmul.f32 %v2111, %v1868
    %v2117 = vmul.f32 %v2108, %v2113
    %v2118 = vadd.f32 %v2116, %v2117
    %v2119 = vtanh.pop %v2118
    %v2120 = vmul.f32 %v2115, %v2119
    %v2122 = vrot.slane %v620, 7
    %v2125 = vrot.slane %v870, 6
    %v2128 = vrot.slane %v1120, 5
    %v2131 = vrot.slane %v1370, 4
    %v2134 = vrot.slane %v1620, 3
    %v2137 = vrot.slane %v1870, 2
    %v2140 = vrot.slane %v2120, 1
    %vm2142 = vcmask 1040384
    %v2143 = vsel %vm2142, %v354, %v2122
    %vm2144 = vcmask 1041408
    %v2145 = vsel %vm2144, %v2143, %v2125
    %vm2146 = vcmask 1042432
    %v2147 = vsel %vm2146, %v2145, %v2128
    %vm2148 = vcmask 1043456
    %v2149 = vsel %vm2148, %v2147, %v2131
    %vm2150 = vcmask 1044480
    %v2151 = vsel %vm2150, %v2149, %v2134
    %vm2152 = vcmask 1045504
    %v2153 = vsel %vm2152, %v2151, %v2137
    %vm2154 = vcmask 1046528
    %v2155 = vsel %vm2154, %v2153, %v2140
    %v2156 = vld [vmem:[#allocation6 + $0x1c0] sm:$0xff]
    %v2157 = vld [vmem:[#allocation6 + $0x1c8] sm:$0xff]
    %v2158 = vld [vmem:[#allocation6 + $0x1d0] sm:$0xff]
    %v2159 = vld [vmem:[#allocation6 + $0x1d8] sm:$0xff]
    %v2160 = vld [vmem:[#allocation6 + $0x1e0] sm:$0xff]
    %v2161 = vld [vmem:[#allocation6 + $0x1e8] sm:$0xff]
    %v2162 = vld [vmem:[#allocation6 + $0x1f0] sm:$0xff]
    %v2163 = vld [vmem:[#allocation6 + $0x1f8] sm:$0xff]
    %v2164 = vld [vmem:[#allocation6 + $0x200] sm:$0xff]
    %v2165 = vld [vmem:[#allocation6 + $0x208] sm:$0xff]
    %v2166 = vld [vmem:[#allocation6 + $0x210] sm:$0xff]
    %v2167 = vld [vmem:[#allocation6 + $0x218] sm:$0xff]
    %v2168 = vld [vmem:[#allocation6 + $0x220] sm:$0xff]
    %v2169 = vld [vmem:[#allocation6 + $0x228] sm:$0xff]
    %v2170 = vld [vmem:[#allocation6 + $0x230] sm:$0xff]
    %v2171 = vld [vmem:[#allocation6 + $0x238] sm:$0xff]
    %v2172 = vlaneseq
    %v2173 = vshrl.u32 %v2172, 7
    %v2174 = vsub.s32 0, %v2173
    %v2175 = vrot.slane %v54, %v2174
    %2176 = vmatprep.subr.mxu0 0.0
    %2177 = vmatpush1.msra.mxu0 %v2171
    %2178 = vmatprep.subr.mxu0 0.0
    %2179 = vmatpush1.msra.mxu0 %v2170
    %2180 = vmatprep.subr.mxu0 0.0
    %2181 = vmatpush1.msra.mxu0 %v2169
    %2182 = vmatprep.subr.mxu0 0.0
    %2183 = vmatpush1.msra.mxu0 %v2168
    %2184 = vmatprep.subr.mxu0 0.0
    %2185 = vmatpush1.msra.mxu0 %v2167
    %2186 = vmatprep.subr.mxu0 0.0
    %2187 = vmatpush1.msra.mxu0 %v2166
    %2188 = vmatprep.subr.mxu0 0.0
    %2189 = vmatpush1.msra.mxu0 %v2165
    %2190 = vmatprep.subr.mxu0 0.0
    %2191 = vmatpush1.msra.mxu0 %v2164
    %2192 = vmatprep.subr.mxu0 0.0
    %2193 = vmatpush1.msra.mxu0 %v2163
    %2194 = vmatprep.subr.mxu0 0.0
    %2195 = vmatpush1.msra.mxu0 %v2162
    %2196 = vmatprep.subr.mxu0 0.0
    %2197 = vmatpush1.msra.mxu0 %v2161
    %2198 = vmatprep.subr.mxu0 0.0
    %2199 = vmatpush1.msra.mxu0 %v2160
    %2200 = vmatprep.subr.mxu0 0.0
    %2201 = vmatpush1.msra.mxu0 %v2159
    %2202 = vmatprep.subr.mxu0 0.0
    %2203 = vmatpush1.msra.mxu0 %v2158
    %2204 = vmatprep.subr.mxu0 0.0
    %2205 = vmatpush1.msra.mxu0 %v2157
    %2206 = vmatprep.subr.mxu0 0.0
    %2207 = vmatpush1.msra.mxu0 %v2156
    %2208 = vmatprep.subr.mxu0 0.0
    %2209 = vmatpush2.msra.mxu0 0.0
    %2210 = vmatprep.subr.mxu0 0.0
    %2211 = vmatpush2.msra.mxu0 0.0
    %2212 = vmatprep.subr.mxu0 0.0
    %2213 = vmatpush2.msra.mxu0 0.0
    %2214 = vmatprep.subr.mxu0 0.0
    %2215 = vmatpush2.msra.mxu0 0.0
    %2216 = vmatprep.subr.mxu0 0.0
    %2217 = vmatpush2.msra.mxu0 0.0
    %2218 = vmatprep.subr.mxu0 0.0
    %2219 = vmatpush2.msra.mxu0 0.0
    %2220 = vmatprep.subr.mxu0 0.0
    %2221 = vmatpush2.msra.mxu0 0.0
    %2222 = vmatprep.subr.mxu0 0.0
    %2223 = vmatpush2.msra.mxu0 0.0
    %2224 = vmatprep.subr.mxu0 0.0
    %2225 = vmatpush2.msra.mxu0 0.0
    %2226 = vmatprep.subr.mxu0 0.0
    %2227 = vmatpush2.msra.mxu0 0.0
    %2228 = vmatprep.subr.mxu0 0.0
    %2229 = vmatpush2.msra.mxu0 0.0
    %2230 = vmatprep.subr.mxu0 0.0
    %2231 = vmatpush2.msra.mxu0 0.0
    %2232 = vmatprep.subr.mxu0 0.0
    %2233 = vmatpush2.msra.mxu0 0.0
    %2234 = vmatprep.subr.mxu0 0.0
    %2235 = vmatpush2.msra.mxu0 0.0
    %2236 = vmatprep.subr.mxu0 0.0
    %2237 = vmatpush2.msra.mxu0 0.0
    %2238 = vmatprep.subr.mxu0 0.0
    %2239 = vmatpush2.msra.mxu0 0.0
    %2240 = vmatprep.mubr.f32.mxu0 0.0
    %2241 = vmatmul.mubr.f32.gmra.mxu0 %v2155
    %v2242 = vpop.f32.mrf.mxu0
    %v2243 = vadd.f32 %v2175, %v2242
    %v2244 = vpop.f32.mrf.mxu0
    %2245 = vdwg.mxu0
    %v2246 = vmax.f32 %v2243, 0.0
    %v2247 = vld [vmem:[#allocation6 + $0x240] sm:$0xff]
    %v2248 = vld [vmem:[#allocation6 + $0x248] sm:$0xff]
    %v2249 = vld [vmem:[#allocation6 + $0x250] sm:$0xff]
    %v2250 = vld [vmem:[#allocation6 + $0x258] sm:$0xff]
    %v2251 = vld [vmem:[#allocation6 + $0x260] sm:$0xff]
    %v2252 = vld [vmem:[#allocation6 + $0x268] sm:$0xff]
    %v2253 = vld [vmem:[#allocation6 + $0x270] sm:$0xff]
    %v2254 = vld [vmem:[#allocation6 + $0x278] sm:$0xff]
    %v2255 = vld [vmem:[#allocation6 + $0x280] sm:$0xff]
    %v2256 = vld [vmem:[#allocation6 + $0x288] sm:$0xff]
    %v2257 = vld [vmem:[#allocation6 + $0x290] sm:$0xff]
    %v2258 = vld [vmem:[#allocation6 + $0x298] sm:$0xff]
    %v2259 = vld [vmem:[#allocation6 + $0x2a0] sm:$0xff]
    %v2260 = vld [vmem:[#allocation6 + $0x2a8] sm:$0xff]
    %v2261 = vld [vmem:[#allocation6 + $0x2b0] sm:$0xff]
    %v2262 = vld [vmem:[#allocation6 + $0x2b8] sm:$0xff]
    %v2263 = vlaneseq
    %v2264 = vshrl.u32 %v2263, 7
    %v2265 = vsub.s32 0, %v2264
    %v2266 = vrot.slane %v55, %v2265
    %2267 = vmatprep.subr.mxu0 0.0
    %2268 = vmatpush1.msra.mxu0 %v2262
    %2269 = vmatprep.subr.mxu0 0.0
    %2270 = vmatpush1.msra.mxu0 %v2261
    %2271 = vmatprep.subr.mxu0 0.0
    %2272 = vmatpush1.msra.mxu0 %v2260
    %2273 = vmatprep.subr.mxu0 0.0
    %2274 = vmatpush1.msra.mxu0 %v2259
    %2275 = vmatprep.subr.mxu0 0.0
    %2276 = vmatpush1.msra.mxu0 %v2258
    %2277 = vmatprep.subr.mxu0 0.0
    %2278 = vmatpush1.msra.mxu0 %v2257
    %2279 = vmatprep.subr.mxu0 0.0
    %2280 = vmatpush1.msra.mxu0 %v2256
    %2281 = vmatprep.subr.mxu0 0.0
    %2282 = vmatpush1.msra.mxu0 %v2255
    %2283 = vmatprep.subr.mxu0 0.0
    %2284 = vmatpush1.msra.mxu0 %v2254
    %2285 = vmatprep.subr.mxu0 0.0
    %2286 = vmatpush1.msra.mxu0 %v2253
    %2287 = vmatprep.subr.mxu0 0.0
    %2288 = vmatpush1.msra.mxu0 %v2252
    %2289 = vmatprep.subr.mxu0 0.0
    %2290 = vmatpush1.msra.mxu0 %v2251
    %2291 = vmatprep.subr.mxu0 0.0
    %2292 = vmatpush1.msra.mxu0 %v2250
    %2293 = vmatprep.subr.mxu0 0.0
    %2294 = vmatpush1.msra.mxu0 %v2249
    %2295 = vmatprep.subr.mxu0 0.0
    %2296 = vmatpush1.msra.mxu0 %v2248
    %2297 = vmatprep.subr.mxu0 0.0
    %2298 = vmatpush1.msra.mxu0 %v2247
    %2299 = vmatprep.subr.mxu0 0.0
    %2300 = vmatpush2.msra.mxu0 0.0
    %2301 = vmatprep.subr.mxu0 0.0
    %2302 = vmatpush2.msra.mxu0 0.0
    %2303 = vmatprep.subr.mxu0 0.0
    %2304 = vmatpush2.msra.mxu0 0.0
    %2305 = vmatprep.subr.mxu0 0.0
    %2306 = vmatpush2.msra.mxu0 0.0
    %2307 = vmatprep.subr.mxu0 0.0
    %2308 = vmatpush2.msra.mxu0 0.0
    %2309 = vmatprep.subr.mxu0 0.0
    %2310 = vmatpush2.msra.mxu0 0.0
    %2311 = vmatprep.subr.mxu0 0.0
    %2312 = vmatpush2.msra.mxu0 0.0
    %2313 = vmatprep.subr.mxu0 0.0
    %2314 = vmatpush2.msra.mxu0 0.0
    %2315 = vmatprep.subr.mxu0 0.0
    %2316 = vmatpush2.msra.mxu0 0.0
    %2317 = vmatprep.subr.mxu0 0.0
    %2318 = vmatpush2.msra.mxu0 0.0
    %2319 = vmatprep.subr.mxu0 0.0
    %2320 = vmatpush2.msra.mxu0 0.0
    %2321 = vmatprep.subr.mxu0 0.0
    %2322 = vmatpush2.msra.mxu0 0.0
    %2323 = vmatprep.subr.mxu0 0.0
    %2324 = vmatpush2.msra.mxu0 0.0
    %2325 = vmatprep.subr.mxu0 0.0
    %2326 = vmatpush2.msra.mxu0 0.0
    %2327 = vmatprep.subr.mxu0 0.0
    %2328 = vmatpush2.msra.mxu0 0.0
    %2329 = vmatprep.subr.mxu0 0.0
    %2330 = vmatpush2.msra.mxu0 0.0
    %2331 = vmatprep.mubr.f32.mxu0 0.0
    %2332 = vmatmul.mubr.f32.gmra.mxu0 %v2246
    %v2333 = vpop.f32.mrf.mxu0
    %v2334 = vadd.f32 %v2266, %v2333
    %v2335 = vpop.f32.mrf.mxu0
    %2336 = vdwg.mxu0
    %2337 = vst [vmem:[#allocation9] sm:$0xff] %v2334
    // Predicated region
    $region26: #{tpu_custom_call.1} parent=1 // pred_check
      _
    $region27: #{tpu_custom_call.1} parent=1 // pred_check_branch
      %2339 = sbr.rel (0) target = $region29
    $region28: #{tpu_custom_call.1} parent=1 // pred_region
      %s2341 = ssub.s32 128, 128
      %2342 = vsyncadd [#allocation5], %s2341
      %s2344 = sshll.u32 [#allocation9], 4
      %s2345 = int_to_ptr.vmem [resolvable:$true] %s2344
      %2347 = dma.vmem_to_hbm [thread:$0]  %s2345, 128, %s3, [#allocation5]
    $region29: #{tpu_custom_call.1} parent=1 // pred_fallthru
      _
    // Predicated region
    $region30: #{tpu_custom_call.1} parent=1 // pred_check
      _
    $region31: #{tpu_custom_call.1} parent=1 // pred_check_branch
      %2349 = sbr.rel (0) target = $region33
    $region32: #{tpu_custom_call.1} parent=1 // pred_region
      %2350 = dma.done [#allocation5], 128
    $region33: #{tpu_custom_call.1} parent=1 // pred_fallthru
      _
    %2351 = vsyncpa [#allocation4], 1
    %2352 = vsyncpa [#allocation7], 1
    %2353 = vsyncpa [#allocation5], 1

</llo_original>
